<compile_context>
chip_gen: v6e
topology: v6e:2x2x1
jax: 0.10.0
libtpu: 0.0.40
codegen_flags: <defaults>
</compile_context>

<pallas_src>
import functools
import math

import jax
import jax.numpy as jnp
from jax.experimental import pallas as pl
from jax.experimental.pallas import tpu as pltpu


# --------------------------------------------------------------------------- kernel


def _soft_rnn_gate_kernel(x_ref, wih_ref, h0_ref, c0_ref, whh_ref, b_ref,
                          wproj_ref, bproj_ref,
                          prob_ref, h1_ref, c1_ref,
                          acc_ref):
    k = pl.program_id(0)

    @pl.when(k == 0)
    def _():
        # Fold the combined LSTM bias (b_ih + b_hh) into the accumulator init.
        acc_ref[...] = jnp.broadcast_to(b_ref[...], acc_ref.shape)

    # Partial contraction over this K tile: f32 x tile cast to bf16 in VMEM (VPU,
    # hidden under the W_ih DMA), bf16 W_ih, f32 accumulation on the MXU.
    acc_ref[...] += jnp.dot(x_ref[...].astype(jnp.bfloat16), wih_ref[...],
                            preferred_element_type=jnp.float32)

    @pl.when(k == pl.num_programs(0) - 1)
    def _():
        h0 = h0_ref[...]
        c0 = c0_ref[...]

        # gates: (B, 4H) = (x @ W_ih^T + b) + h0 @ W_hh^T   (bias already in acc)
        gates = acc_ref[...] + jnp.dot(h0.astype(jnp.bfloat16), whh_ref[...],
                                       preferred_element_type=jnp.float32)

        H = h0.shape[-1]
        # One full-width EUP pass over the dense (B, 4H) vreg:
        #   i, f, o -> sigmoid(x);  g -> tanh(x) = 2*sigmoid(2x) - 1.
        lane = jax.lax.broadcasted_iota(jnp.int32, gates.shape, 1)
        is_g = jnp.logical_and(lane >= 2 * H, lane < 3 * H)
        act = jax.nn.sigmoid(jnp.where(is_g, 2.0 * gates, gates))
        act = jnp.where(is_g, 2.0 * act - 1.0, act)

        i_g = act[:, 0 * H:1 * H]
        f_g = act[:, 1 * H:2 * H]
        g_g = act[:, 2 * H:3 * H]
        o_g = act[:, 3 * H:4 * H]

        c1 = f_g * c0 + i_g * g_g
        h1 = o_g * jnp.tanh(c1)

        # H -> 1 projection as VPU multiply + lane reduction (avoids an N=1 MXU
        # pass).  b_proj is a scalar read from SMEM.
        proj = jnp.sum(h1 * wproj_ref[...], axis=-1, keepdims=True) + bproj_ref[0, 0]
        prob_ref[...] = jax.nn.sigmoid(proj)
        h1_ref[...] = h1
        c1_ref[...] = c1


# ------------------------------------------------------------------ tiling / params


def _round_up(x, m):
    return ((x + m - 1) // m) * m


def _vmem_limit_bytes():
    """Generation-aware scoped-VMEM budget (64 MiB physical on v7x, 128 MiB v5e/v6e)."""
    try:
        cap = int(pltpu.get_tpu_info().vmem_capacity_bytes)
    except Exception:
        cap = 64 << 20          # conservative default: v7x physical VMEM
    # Leave headroom for Mosaic internal scratch and other reservations.
    return max(32 << 20, min((cap * 3) // 4, 96 << 20))


def _k_tiling(d_in, four_h, batch, vmem_limit_bytes):
    """Bytes-budgeted K tile (multiple of 128) and the padded D_in it divides."""
    d128 = _round_up(max(d_in, 1), 128)
    # Bytes streamed per K element: bf16 W_ih row + f32 x row (both double-buffered).
    per_row = four_h * 2 + batch * 4
    stream_budget = vmem_limit_bytes // 2          # half for the two streamed tiles
    tk = stream_budget // (2 * per_row)            # 2 == pipeline buffer count
    tk = min(tk, (8 << 20) // (four_h * 2))        # cap the W_ih tile at ~8 MiB
    tk = (tk // 128) * 128
    tk = max(128, min(tk, d128))
    d_pad = _round_up(d_in, tk)                    # multiple of tk (and of 128)
    return tk, d_pad


def prepare_params(params, *, batch_size=64, vmem_limit_bytes=None):
    """One-time prep: transpose + bias fold + bf16 cast + K-tile-aligned zero pad.

    batch_size is only a sizing hint for the K-tile VMEM budget (the f32 x tile);
    the generous budgeting leaves slack if the runtime batch differs.
    """
    w_ih = jnp.asarray(params["w_ih"], jnp.float32)        # (4H, D_in)
    w_hh = jnp.asarray(params["w_hh"], jnp.float32)        # (4H, H)
    four_h, d_in = w_ih.shape
    if vmem_limit_bytes is None:
        vmem_limit_bytes = _vmem_limit_bytes()
    tk, d_pad = _k_tiling(d_in, four_h, batch_size, vmem_limit_bytes)

    # (D_pad, 4H) bf16, zero-padded rows contribute nothing to the contraction.
    w_ih_t = jnp.zeros((d_pad, four_h), jnp.bfloat16)
    w_ih_t = w_ih_t.at[:d_in].set(w_ih.T.astype(jnp.bfloat16))

    return {
        "w_ih_t": w_ih_t,                                                     # (D_pad, 4H) bf16
        "w_hh_t": w_hh.T.astype(jnp.bfloat16),                                # (H, 4H)    bf16
        "b": (params["b_ih"] + params["b_hh"]).reshape(1, -1).astype(jnp.float32),  # (1, 4H)
        "w_proj": jnp.asarray(params["w_proj"], jnp.float32),                 # (1, H)
        "b_proj": jnp.asarray(params["b_proj"], jnp.float32).reshape(1, 1),   # (1, 1)
        # Static tiling metadata (plain Python ints; passed as static jit args).
        "d_in": int(d_in),
        "k_tile": int(tk),
        "vmem_limit": int(vmem_limit_bytes),
    }


# ------------------------------------------------------------------------- wrapper


@functools.partial(jax.jit,
                   static_argnames=("k_tile", "d_in", "vmem_limit", "training", "tuned"))
def _soft_rnn_gate_jit(x, h0_in, c0_in, w_ih_t, w_hh_t, b, w_proj, b_proj, *,
                       k_tile, d_in, vmem_limit, training, tuned):
    B = x.shape[0]
    H = h0_in.shape[-1]
    G = w_ih_t.shape[-1]
    d_pad = w_ih_t.shape[0]

    x_flat = x.reshape(B, -1).astype(jnp.float32)          # (B, D_in), cast to bf16 in-kernel
    assert x_flat.shape[-1] == d_in, (x_flat.shape, d_in)
    if d_pad > d_in:                                       # zero pad: exact contraction
        x_flat = jnp.pad(x_flat, ((0, 0), (0, d_pad - d_in)))

    h0 = h0_in.reshape(B, H).astype(jnp.float32)
    c0 = c0_in.reshape(B, H).astype(jnp.float32)

    k_steps = d_pad // k_tile

    if tuned:
        # Grid-invariant operands: single-buffered (DMA'd once; frees VMEM for K tile).
        def inv(shape):
            return pl.BlockSpec(shape, lambda k, _n=len(shape): (0,) * _n,
                                pipeline_mode=pl.Buffered(1))
        cparams = pltpu.CompilerParams(dimension_semantics=("arbitrary",),
                                       vmem_limit_bytes=vmem_limit)
    else:
        def inv(shape):
            return pl.BlockSpec(shape, lambda k, _n=len(shape): (0,) * _n)
        cparams = pltpu.CompilerParams(dimension_semantics=("arbitrary",))

    grid_spec = pltpu.PrefetchScalarGridSpec(
        num_scalar_prefetch=0,
        grid=(k_steps,),
        in_specs=[
            pl.BlockSpec((B, k_tile), lambda k: (0, k)),    # x K-tile (f32 stream)
            pl.BlockSpec((k_tile, G), lambda k: (k, 0)),    # W_ih K-tile (bf16 stream)
            inv((B, H)),                                    # h0
            inv((B, H)),                                    # c0
            inv((H, G)),                                    # W_hh (bf16)
            inv((1, G)),                                    # combined bias
            inv((1, H)),                                    # proj weight row
            pl.BlockSpec(memory_space=pltpu.MemorySpace.SMEM),  # proj bias scalar
        ],
        out_specs=(
            pl.BlockSpec((B, 1), lambda k: (0, 0)),
            pl.BlockSpec((B, H), lambda k: (0, 0)),
            pl.BlockSpec((B, H), lambda k: (0, 0)),
        ),
        scratch_shapes=[pltpu.VMEM((B, G), jnp.float32)],
    )

    prob, h1, c1 = pl.pallas_call(
        _soft_rnn_gate_kernel,
        out_shape=(
            jax.ShapeDtypeStruct((B, 1), jnp.float32),
            jax.ShapeDtypeStruct((B, H), jnp.float32),
            jax.ShapeDtypeStruct((B, H), jnp.float32),
        ),
        grid_spec=grid_spec,
        compiler_params=cparams,
    )(x_flat, w_ih_t, h0, c0, w_hh_t, b, w_proj, b_proj)

    gate = prob.reshape(B, 1, 1, 1)
    if not training:
        gate = (gate > 0.5).astype(jnp.float32)
    return gate, prob, (h1.reshape(1, B, H), c1.reshape(1, B, H))


_TUNED_OK = None  # cached result of the one-time tuned-path compile probe


def soft_rnn_gate(x, hidden, prepped, *, training=True):
    """x: (B, C, H, W) f32. hidden: (h0, c0) each (1, B, hidden_dim).
    prepped: output of prepare_params().

    Returns (gate, prob, new_hidden) matching the PyTorch forward:
      gate: (B, 1, 1, 1), prob: (B, 1), new_hidden: (h1, c1) each (1, B, H).
    """
    global _TUNED_OK
    args = (x, hidden[0], hidden[1], prepped["w_ih_t"], prepped["w_hh_t"],
            prepped["b"], prepped["w_proj"], prepped["b_proj"])
    kw = dict(k_tile=prepped["k_tile"], d_in=prepped["d_in"],
              vmem_limit=prepped["vmem_limit"], training=training)
    if _TUNED_OK is None:
        try:
            out = _soft_rnn_gate_jit(*args, tuned=True, **kw)
            jax.block_until_ready(out)
            _TUNED_OK = True
            return out
        except Exception:
            # Fallback: plain double-buffered specs + default VMEM limit, in case this
            # jax/libtpu rejects pl.Buffered(1) or the explicit vmem_limit_bytes.
            _TUNED_OK = False
    return _soft_rnn_gate_jit(*args, tuned=_TUNED_OK, **kw)


# ------------------------------------------------------------------- reference/init


def soft_rnn_gate_ref(x, hidden, params, *, training=True):
    """Pure-JAX f32 reference of the PyTorch forward (for tolerance check)."""
    B = x.shape[0]
    xf = x.reshape(B, -1).astype(jnp.float32)
    h0 = hidden[0].reshape(B, -1).astype(jnp.float32)
    c0 = hidden[1].reshape(B, -1).astype(jnp.float32)
    gates = (xf @ params["w_ih"].T + h0 @ params["w_hh"].T
             + params["b_ih"] + params["b_hh"])
    H = h0.shape[-1]
    i = jax.nn.sigmoid(gates[:, 0 * H:1 * H])
    f = jax.nn.sigmoid(gates[:, 1 * H:2 * H])
    g = jnp.tanh(gates[:, 2 * H:3 * H])
    o = jax.nn.sigmoid(gates[:, 3 * H:4 * H])
    c1 = f * c0 + i * g
    h1 = o * jnp.tanh(c1)
    prob = jax.nn.sigmoid(h1 @ params["w_proj"].T + params["b_proj"])
    gate = prob.reshape(B, 1, 1, 1)
    if not training:
        gate = (gate > 0.5).astype(jnp.float32)
    return gate, prob, (h1.reshape(1, B, H), c1.reshape(1, B, H))


def init_params(key, input_dim, hidden_dim):
    # PyTorch nn.LSTM / nn.Linear default init: U(-1/sqrt(fan), 1/sqrt(fan)).
    k_lstm = 1.0 / math.sqrt(hidden_dim)
    k_proj = 1.0 / math.sqrt(hidden_dim)
    ks = jax.random.split(key, 6)
    u = lambda k, shape, bound: jax.random.uniform(
        k, shape, dtype=jnp.float32, minval=-bound, maxval=bound)
    return {
        "w_ih": u(ks[0], (4 * hidden_dim, input_dim), k_lstm),
        "w_hh": u(ks[1], (4 * hidden_dim, hidden_dim), k_lstm),
        "b_ih": u(ks[2], (4 * hidden_dim,), k_lstm),
        "b_hh": u(ks[3], (4 * hidden_dim,), k_lstm),
        "w_proj": u(ks[4], (1, hidden_dim), k_proj),
        "b_proj": u(ks[5], (1,), k_proj),
    }


if __name__ == "__main__":
    key = jax.random.PRNGKey(0)
    kx, kp = jax.random.split(key)

    B, C, Hs, Ws = 2, 4, 16, 16          # x: NCHW conv feature map
    hidden_dim = 32
    input_dim = C * Hs * Ws              # x.view(1, B, -1) -> 1024 features

    x = jax.random.normal(kx, (B, C, Hs, Ws), dtype=jnp.float32)
    params = init_params(kp, input_dim, hidden_dim)
    prepped = prepare_params(params, batch_size=B)   # one-time: transpose/pad/bf16/bias fold

    # init_hidden(batch_size): zeros of shape (1, B, hidden_dim)
    hidden = (jnp.zeros((1, B, hidden_dim), jnp.float32),
              jnp.zeros((1, B, hidden_dim), jnp.float32))

    gate, prob, new_hidden = soft_rnn_gate(x, hidden, prepped, training=True)
    jax.block_until_ready((gate, prob, new_hidden))

    assert gate.shape == (B, 1, 1, 1)
    assert prob.shape == (B, 1)
    assert new_hidden[0].shape == (1, B, hidden_dim)
    assert new_hidden[1].shape == (1, B, hidden_dim)

    # Tolerance check vs. f32 reference (bf16 weights introduce small drift).
    gate_r, prob_r, hid_r = soft_rnn_gate_ref(x, hidden, params, training=True)
    assert float(jnp.max(jnp.abs(prob - prob_r))) < 5e-2
    assert float(jnp.max(jnp.abs(new_hidden[0] - hid_r[0]))) < 5e-2
    assert float(jnp.max(jnp.abs(new_hidden[1] - hid_r[1]))) < 5e-2

    print("KERNEL_OK")
</pallas_src>

<mosaic_0001>
module attributes {stable_mosaic.version = 11 : i64} {
  func.func @_soft_rnn_gate_kernel(%arg0: i32, %arg1: memref<2x1024xf32, #tpu.memory_space<vmem>>, %arg2: memref<1024x128xbf16, #tpu.memory_space<vmem>>, %arg3: memref<2x32xf32, #tpu.memory_space<vmem>>, %arg4: memref<2x32xf32, #tpu.memory_space<vmem>>, %arg5: memref<32x128xbf16, #tpu.memory_space<vmem>>, %arg6: memref<1x128xf32, #tpu.memory_space<vmem>>, %arg7: memref<1x32xf32, #tpu.memory_space<vmem>>, %arg8: memref<1x1xf32, #tpu.memory_space<smem>>, %arg9: memref<2x1xf32, #tpu.memory_space<vmem>>, %arg10: memref<2x32xf32, #tpu.memory_space<vmem>>, %arg11: memref<2x32xf32, #tpu.memory_space<vmem>>, %arg12: memref<2x128xf32, #tpu.memory_space<vmem>>) attributes {dimension_semantics = [#tpu.dimension_semantics<arbitrary>], iteration_bounds = array<i64: 1>, scalar_prefetch = 0 : i64, scratch_operands = 1 : i64, tpu.core_type = #tpu.core_type<tc>, window_params = [{transform_indices = @transform_0, window_bounds = array<i64: 2, 1024>}, {transform_indices = @transform_1, window_bounds = array<i64: 1024, 128>}, {pipeline_mode = #tpu.pipeline_mode<synchronous>, transform_indices = @transform_2, window_bounds = array<i64: 2, 32>}, {pipeline_mode = #tpu.pipeline_mode<synchronous>, transform_indices = @transform_3, window_bounds = array<i64: 2, 32>}, {pipeline_mode = #tpu.pipeline_mode<synchronous>, transform_indices = @transform_4, window_bounds = array<i64: 32, 128>}, {pipeline_mode = #tpu.pipeline_mode<synchronous>, transform_indices = @transform_5, window_bounds = array<i64: 1, 128>}, {pipeline_mode = #tpu.pipeline_mode<synchronous>, transform_indices = @transform_6, window_bounds = array<i64: 1, 32>}, {transform_indices = @transform_7, window_bounds = array<i64: 1, 1>}, {pipeline_mode = #tpu.pipeline_mode<synchronous>, transform_indices = @transform_8, window_bounds = array<i64: 2, 1>}, {pipeline_mode = #tpu.pipeline_mode<synchronous>, transform_indices = @transform_9, window_bounds = array<i64: 2, 32>}, {pipeline_mode = #tpu.pipeline_mode<synchronous>, transform_indices = @transform_10, window_bounds = array<i64: 2, 32>}]} {
    %c0_i32 = arith.constant 0 : i32
    %0 = arith.cmpi eq, %arg0, %c0_i32 : i32
    %1 = arith.extui %0 : i1 to i32
    %c0_i32_0 = arith.constant 0 : i32
    %2 = arith.cmpi ne, %1, %c0_i32_0 : i32
    scf.if %2 {
      %c0_10 = arith.constant 0 : index
      %c0_11 = arith.constant 0 : index
      %13 = vector.load %arg6[%c0_10, %c0_11] : memref<1x128xf32, #tpu.memory_space<vmem>>, vector<1x128xf32>
      %14 = vector.shape_cast %13 : vector<1x128xf32> to vector<1x128xf32>
      %15 = vector.broadcast %14 : vector<1x128xf32> to vector<2x128xf32>
      %c0_12 = arith.constant 0 : index
      %c0_13 = arith.constant 0 : index
      %16 = vector.load %arg12[%c0_12, %c0_13] : memref<2x128xf32, #tpu.memory_space<vmem>>, vector<2x128xf32>
      tpu.vector_store %arg12[%c0_12, %c0_13], %15 {strides = array<i32>} : memref<2x128xf32, #tpu.memory_space<vmem>>, vector<2x128xf32>,
    } else {
    }
    %c0 = arith.constant 0 : index
    %c0_1 = arith.constant 0 : index
    %3 = vector.load %arg12[%c0, %c0_1] : memref<2x128xf32, #tpu.memory_space<vmem>>, vector<2x128xf32>
    %c0_2 = arith.constant 0 : index
    %c0_3 = arith.constant 0 : index
    %4 = vector.load %arg1[%c0_2, %c0_3] : memref<2x1024xf32, #tpu.memory_space<vmem>>, vector<2x1024xf32>
    %5 = arith.truncf %4 : vector<2x1024xf32> to vector<2x1024xbf16>
    %c0_4 = arith.constant 0 : index
    %c0_5 = arith.constant 0 : index
    %6 = vector.load %arg2[%c0_4, %c0_5] : memref<1024x128xbf16, #tpu.memory_space<vmem>>, vector<1024x128xbf16>
    %cst = arith.constant dense<0.000000e+00> : vector<2x128xf32>
    %7 = tpu.matmul %5, %6, %cst {dimension_numbers = #tpu.dot_dimension_numbers<[1], [0], [0], [1], [0, 0, 1, 1], [], []>} : vector<2x1024xbf16>, vector<1024x128xbf16>, vector<2x128xf32> -> vector<2x128xf32>
    %8 = arith.addf %3, %7 : vector<2x128xf32>
    %c0_6 = arith.constant 0 : index
    %c0_7 = arith.constant 0 : index
    %9 = vector.load %arg12[%c0_6, %c0_7] : memref<2x128xf32, #tpu.memory_space<vmem>>, vector<2x128xf32>
    tpu.vector_store %arg12[%c0_6, %c0_7], %8 {strides = array<i32>} : memref<2x128xf32, #tpu.memory_space<vmem>>, vector<2x128xf32>,
    %c0_i32_8 = arith.constant 0 : i32
    %10 = arith.cmpi eq, %arg0, %c0_i32_8 : i32
    %11 = arith.extui %10 : i1 to i32
    %c0_i32_9 = arith.constant 0 : i32
    %12 = arith.cmpi ne, %11, %c0_i32_9 : i32
    scf.if %12 {
      %c0_10 = arith.constant 0 : index
      %c0_11 = arith.constant 0 : index
      %13 = vector.load %arg3[%c0_10, %c0_11] : memref<2x32xf32, #tpu.memory_space<vmem>>, vector<2x32xf32>
      %c0_12 = arith.constant 0 : index
      %c0_13 = arith.constant 0 : index
      %14 = vector.load %arg4[%c0_12, %c0_13] : memref<2x32xf32, #tpu.memory_space<vmem>>, vector<2x32xf32>
      %c0_14 = arith.constant 0 : index
      %c0_15 = arith.constant 0 : index
      %15 = vector.load %arg12[%c0_14, %c0_15] : memref<2x128xf32, #tpu.memory_space<vmem>>, vector<2x128xf32>
      %16 = arith.truncf %13 : vector<2x32xf32> to vector<2x32xbf16>
      %c0_16 = arith.constant 0 : index
      %c0_17 = arith.constant 0 : index
      %17 = vector.load %arg5[%c0_16, %c0_17] : memref<32x128xbf16, #tpu.memory_space<vmem>>, vector<32x128xbf16>
      %cst_18 = arith.constant dense<0.000000e+00> : vector<2x128xf32>
      %18 = tpu.matmul %16, %17, %cst_18 {dimension_numbers = #tpu.dot_dimension_numbers<[1], [0], [0], [1], [0, 0, 1, 1], [], []>} : vector<2x32xbf16>, vector<32x128xbf16>, vector<2x128xf32> -> vector<2x128xf32>
      %19 = arith.addf %15, %18 : vector<2x128xf32>
      %20 = tpu.iota {dimensions = array<i32: 1>} : vector<2x128xi32>
      %c64_i32 = arith.constant 64 : i32
      %21 = vector.broadcast %c64_i32 : i32 to vector<2x128xi32>
      %22 = arith.cmpi sge, %20, %21 : vector<2x128xi32>
      %c96_i32 = arith.constant 96 : i32
      %23 = vector.broadcast %c96_i32 : i32 to vector<2x128xi32>
      %24 = arith.cmpi slt, %20, %23 : vector<2x128xi32>
      %25 = arith.andi %22, %24 : vector<2x128xi1>
      %cst_19 = arith.constant 2.000000e+00 : f32
      %26 = vector.broadcast %cst_19 : f32 to vector<2x128xf32>
      %27 = arith.mulf %26, %19 : vector<2x128xf32>
      %28 = arith.select %25, %27, %19 : vector<2x128xi1>, vector<2x128xf32>
      %29 = arith.negf %28 : vector<2x128xf32>
      %30 = math.exp %29 : vector<2x128xf32>
      %cst_20 = arith.constant 1.000000e+00 : f32
      %31 = vector.broadcast %cst_20 : f32 to vector<2x128xf32>
      %32 = arith.addf %31, %30 : vector<2x128xf32>
      %33 = arith.divf %31, %32 : vector<2x128xf32>
      %cst_21 = arith.constant 2.000000e+00 : f32
      %34 = vector.broadcast %cst_21 : f32 to vector<2x128xf32>
      %35 = arith.mulf %34, %33 : vector<2x128xf32>
      %cst_22 = arith.constant 1.000000e+00 : f32
      %36 = vector.broadcast %cst_22 : f32 to vector<2x128xf32>
      %37 = arith.subf %35, %36 : vector<2x128xf32>
      %38 = arith.select %25, %37, %33 : vector<2x128xi1>, vector<2x128xf32>
      %39 = vector.extract_strided_slice %38 {offsets = [0, 0], sizes = [2, 32], strides = [1, 1]} : vector<2x128xf32> to vector<2x32xf32>
      %40 = vector.extract_strided_slice %38 {offsets = [0, 32], sizes = [2, 32], strides = [1, 1]} : vector<2x128xf32> to vector<2x32xf32>
      %41 = vector.extract_strided_slice %38 {offsets = [0, 64], sizes = [2, 32], strides = [1, 1]} : vector<2x128xf32> to vector<2x32xf32>
      %42 = vector.extract_strided_slice %38 {offsets = [0, 96], sizes = [2, 32], strides = [1, 1]} : vector<2x128xf32> to vector<2x32xf32>
      %43 = arith.mulf %40, %14 : vector<2x32xf32>
      %44 = arith.mulf %39, %41 : vector<2x32xf32>
      %45 = arith.addf %43, %44 : vector<2x32xf32>
      %46 = math.tanh %45 : vector<2x32xf32>
      %47 = arith.mulf %42, %46 : vector<2x32xf32>
      %c0_23 = arith.constant 0 : index
      %c0_24 = arith.constant 0 : index
      %48 = vector.load %arg7[%c0_23, %c0_24] : memref<1x32xf32, #tpu.memory_space<vmem>>, vector<1x32xf32>
      %49 = vector.broadcast %48 : vector<1x32xf32> to vector<2x32xf32>
      %50 = arith.mulf %47, %49 : vector<2x32xf32>
      %cst_25 = arith.constant dense<0.000000e+00> : vector<2xf32>
      %51 = vector.multi_reduction <add>, %50, %cst_25 [1] : vector<2x32xf32> to vector<2xf32>
      %52 = vector.shape_cast %51 : vector<2xf32> to vector<2x1xf32>
      %c0_26 = arith.constant 0 : index
      %c0_27 = arith.constant 0 : index
      %53 = memref.load %arg8[%c0_26, %c0_27] : memref<1x1xf32, #tpu.memory_space<smem>>
      %54 = vector.broadcast %53 : f32 to vector<2x1xf32>
      %55 = arith.addf %52, %54 : vector<2x1xf32>
      %56 = arith.negf %55 : vector<2x1xf32>
      %57 = math.exp %56 : vector<2x1xf32>
      %cst_28 = arith.constant 1.000000e+00 : f32
      %58 = vector.broadcast %cst_28 : f32 to vector<2x1xf32>
      %59 = arith.addf %58, %57 : vector<2x1xf32>
      %60 = arith.divf %58, %59 : vector<2x1xf32>
      %c0_29 = arith.constant 0 : index
      %c0_30 = arith.constant 0 : index
      %61 = vector.load %arg9[%c0_29, %c0_30] : memref<2x1xf32, #tpu.memory_space<vmem>>, vector<2x1xf32>
      tpu.vector_store %arg9[%c0_29, %c0_30], %60 {strides = array<i32>} : memref<2x1xf32, #tpu.memory_space<vmem>>, vector<2x1xf32>,
      %c0_31 = arith.constant 0 : index
      %c0_32 = arith.constant 0 : index
      %62 = vector.load %arg10[%c0_31, %c0_32] : memref<2x32xf32, #tpu.memory_space<vmem>>, vector<2x32xf32>
      tpu.vector_store %arg10[%c0_31, %c0_32], %47 {strides = array<i32>} : memref<2x32xf32, #tpu.memory_space<vmem>>, vector<2x32xf32>,
      %c0_33 = arith.constant 0 : index
      %c0_34 = arith.constant 0 : index
      %63 = vector.load %arg11[%c0_33, %c0_34] : memref<2x32xf32, #tpu.memory_space<vmem>>, vector<2x32xf32>
      tpu.vector_store %arg11[%c0_33, %c0_34], %45 {strides = array<i32>} : memref<2x32xf32, #tpu.memory_space<vmem>>, vector<2x32xf32>,
    } else {
    }
    return
  }
  func.func @transform_0(%arg0: i32) -> (i32, i32) {
    %c0_i32 = arith.constant 0 : i32
    %c0_i32_0 = arith.constant 0 : i32
    return %c0_i32, %arg0 : i32, i32
  }
  func.func @transform_1(%arg0: i32) -> (i32, i32) {
    %c0_i32 = arith.constant 0 : i32
    %c0_i32_0 = arith.constant 0 : i32
    return %arg0, %c0_i32 : i32, i32
  }
  func.func @transform_2(%arg0: i32) -> (i32, i32) {
    %c0_i32 = arith.constant 0 : i32
    %c0_i32_0 = arith.constant 0 : i32
    %c0_i32_1 = arith.constant 0 : i32
    return %c0_i32, %c0_i32_0 : i32, i32
  }
  func.func @transform_3(%arg0: i32) -> (i32, i32) {
    %c0_i32 = arith.constant 0 : i32
    %c0_i32_0 = arith.constant 0 : i32
    %c0_i32_1 = arith.constant 0 : i32
    return %c0_i32, %c0_i32_0 : i32, i32
  }
  func.func @transform_4(%arg0: i32) -> (i32, i32) {
    %c0_i32 = arith.constant 0 : i32
    %c0_i32_0 = arith.constant 0 : i32
    %c0_i32_1 = arith.constant 0 : i32
    return %c0_i32, %c0_i32_0 : i32, i32
  }
  func.func @transform_5(%arg0: i32) -> (i32, i32) {
    %c0_i32 = arith.constant 0 : i32
    %c0_i32_0 = arith.constant 0 : i32
    %c0_i32_1 = arith.constant 0 : i32
    return %c0_i32, %c0_i32_0 : i32, i32
  }
  func.func @transform_6(%arg0: i32) -> (i32, i32) {
    %c0_i32 = arith.constant 0 : i32
    %c0_i32_0 = arith.constant 0 : i32
    %c0_i32_1 = arith.constant 0 : i32
    return %c0_i32, %c0_i32_0 : i32, i32
  }
  func.func @transform_7(%arg0: i32) -> (i32, i32) {
    %c0_i32 = arith.constant 0 : i32
    %c0_i32_0 = arith.constant 0 : i32
    %c0_i32_1 = arith.constant 0 : i32
    return %c0_i32, %c0_i32_0 : i32, i32
  }
  func.func @transform_8(%arg0: i32) -> (i32, i32) {
    %c0_i32 = arith.constant 0 : i32
    %c0_i32_0 = arith.constant 0 : i32
    %c0_i32_1 = arith.constant 0 : i32
    return %c0_i32, %c0_i32_0 : i32, i32
  }
  func.func @transform_9(%arg0: i32) -> (i32, i32) {
    %c0_i32 = arith.constant 0 : i32
    %c0_i32_0 = arith.constant 0 : i32
    %c0_i32_1 = arith.constant 0 : i32
    return %c0_i32, %c0_i32_0 : i32, i32
  }
  func.func @transform_10(%arg0: i32) -> (i32, i32) {
    %c0_i32 = arith.constant 0 : i32
    %c0_i32_0 = arith.constant 0 : i32
    %c0_i32_1 = arith.constant 0 : i32
    return %c0_i32, %c0_i32_0 : i32, i32
  }
}

module attributes {stable_mosaic.version = 11 : i64} {
  func.func @_soft_rnn_gate_kernel(%arg0: i32, %arg1: memref<2x1024xf32, #tpu.memory_space<vmem>>, %arg2: memref<1024x128xbf16, #tpu.memory_space<vmem>>, %arg3: memref<2x32xf32, #tpu.memory_space<vmem>>, %arg4: memref<2x32xf32, #tpu.memory_space<vmem>>, %arg5: memref<32x128xbf16, #tpu.memory_space<vmem>>, %arg6: memref<1x128xf32, #tpu.memory_space<vmem>>, %arg7: memref<1x32xf32, #tpu.memory_space<vmem>>, %arg8: memref<1x1xf32, #tpu.memory_space<smem>>, %arg9: memref<2x1xf32, #tpu.memory_space<vmem>>, %arg10: memref<2x32xf32, #tpu.memory_space<vmem>>, %arg11: memref<2x32xf32, #tpu.memory_space<vmem>>, %arg12: memref<2x128xf32, #tpu.memory_space<vmem>>) attributes {dimension_semantics = [#tpu.dimension_semantics<arbitrary>], iteration_bounds = array<i64: 1>, scalar_prefetch = 0 : i64, scratch_operands = 1 : i64, tpu.core_type = #tpu.core_type<tc>, window_params = [{transform_indices = @transform_0, window_bounds = array<i64: 2, 1024>}, {transform_indices = @transform_1, window_bounds = array<i64: 1024, 128>}, {pipeline_mode = #tpu.pipeline_mode<synchronous>, transform_indices = @transform_2, window_bounds = array<i64: 2, 32>}, {pipeline_mode = #tpu.pipeline_mode<synchronous>, transform_indices = @transform_3, window_bounds = array<i64: 2, 32>}, {pipeline_mode = #tpu.pipeline_mode<synchronous>, transform_indices = @transform_4, window_bounds = array<i64: 32, 128>}, {pipeline_mode = #tpu.pipeline_mode<synchronous>, transform_indices = @transform_5, window_bounds = array<i64: 1, 128>}, {pipeline_mode = #tpu.pipeline_mode<synchronous>, transform_indices = @transform_6, window_bounds = array<i64: 1, 32>}, {transform_indices = @transform_7, window_bounds = array<i64: 1, 1>}, {pipeline_mode = #tpu.pipeline_mode<synchronous>, transform_indices = @transform_8, window_bounds = array<i64: 2, 1>}, {pipeline_mode = #tpu.pipeline_mode<synchronous>, transform_indices = @transform_9, window_bounds = array<i64: 2, 32>}, {pipeline_mode = #tpu.pipeline_mode<synchronous>, transform_indices = @transform_10, window_bounds = array<i64: 2, 32>}]} {
    %c0_i32 = arith.constant 0 : i32
    %0 = arith.cmpi eq, %arg0, %c0_i32 : i32
    %1 = arith.extui %0 : i1 to i32
    %c0_i32_0 = arith.constant 0 : i32
    %2 = arith.cmpi ne, %1, %c0_i32_0 : i32
    scf.if %2 {
      %c0_10 = arith.constant 0 : index
      %c0_11 = arith.constant 0 : index
      %13 = vector.load %arg6[%c0_10, %c0_11] : memref<1x128xf32, #tpu.memory_space<vmem>>, vector<1x128xf32>
      %14 = vector.shape_cast %13 : vector<1x128xf32> to vector<1x128xf32>
      %15 = vector.broadcast %14 : vector<1x128xf32> to vector<2x128xf32>
      %c0_12 = arith.constant 0 : index
      %c0_13 = arith.constant 0 : index
      %16 = vector.load %arg12[%c0_12, %c0_13] : memref<2x128xf32, #tpu.memory_space<vmem>>, vector<2x128xf32>
      tpu.vector_store %arg12[%c0_12, %c0_13], %15 {strides = array<i32>} : memref<2x128xf32, #tpu.memory_space<vmem>>, vector<2x128xf32>,
    } else {
    }
    %c0 = arith.constant 0 : index
    %c0_1 = arith.constant 0 : index
    %3 = vector.load %arg12[%c0, %c0_1] : memref<2x128xf32, #tpu.memory_space<vmem>>, vector<2x128xf32>
    %c0_2 = arith.constant 0 : index
    %c0_3 = arith.constant 0 : index
    %4 = vector.load %arg1[%c0_2, %c0_3] : memref<2x1024xf32, #tpu.memory_space<vmem>>, vector<2x1024xf32>
    %5 = arith.truncf %4 : vector<2x1024xf32> to vector<2x1024xbf16>
    %c0_4 = arith.constant 0 : index
    %c0_5 = arith.constant 0 : index
    %6 = vector.load %arg2[%c0_4, %c0_5] : memref<1024x128xbf16, #tpu.memory_space<vmem>>, vector<1024x128xbf16>
    %cst = arith.constant dense<0.000000e+00> : vector<2x128xf32>
    %7 = tpu.matmul %5, %6, %cst {dimension_numbers = #tpu.dot_dimension_numbers<[1], [0], [0], [1], [0, 0, 1, 1], [], []>} : vector<2x1024xbf16>, vector<1024x128xbf16>, vector<2x128xf32> -> vector<2x128xf32>
    %8 = arith.addf %3, %7 : vector<2x128xf32>
    %c0_6 = arith.constant 0 : index
    %c0_7 = arith.constant 0 : index
    %9 = vector.load %arg12[%c0_6, %c0_7] : memref<2x128xf32, #tpu.memory_space<vmem>>, vector<2x128xf32>
    tpu.vector_store %arg12[%c0_6, %c0_7], %8 {strides = array<i32>} : memref<2x128xf32, #tpu.memory_space<vmem>>, vector<2x128xf32>,
    %c0_i32_8 = arith.constant 0 : i32
    %10 = arith.cmpi eq, %arg0, %c0_i32_8 : i32
    %11 = arith.extui %10 : i1 to i32
    %c0_i32_9 = arith.constant 0 : i32
    %12 = arith.cmpi ne, %11, %c0_i32_9 : i32
    scf.if %12 {
      %c0_10 = arith.constant 0 : index
      %c0_11 = arith.constant 0 : index
      %13 = vector.load %arg3[%c0_10, %c0_11] : memref<2x32xf32, #tpu.memory_space<vmem>>, vector<2x32xf32>
      %c0_12 = arith.constant 0 : index
      %c0_13 = arith.constant 0 : index
      %14 = vector.load %arg4[%c0_12, %c0_13] : memref<2x32xf32, #tpu.memory_space<vmem>>, vector<2x32xf32>
      %c0_14 = arith.constant 0 : index
      %c0_15 = arith.constant 0 : index
      %15 = vector.load %arg12[%c0_14, %c0_15] : memref<2x128xf32, #tpu.memory_space<vmem>>, vector<2x128xf32>
      %16 = arith.truncf %13 : vector<2x32xf32> to vector<2x32xbf16>
      %c0_16 = arith.constant 0 : index
      %c0_17 = arith.constant 0 : index
      %17 = vector.load %arg5[%c0_16, %c0_17] : memref<32x128xbf16, #tpu.memory_space<vmem>>, vector<32x128xbf16>
      %cst_18 = arith.constant dense<0.000000e+00> : vector<2x128xf32>
      %18 = tpu.matmul %16, %17, %cst_18 {dimension_numbers = #tpu.dot_dimension_numbers<[1], [0], [0], [1], [0, 0, 1, 1], [], []>} : vector<2x32xbf16>, vector<32x128xbf16>, vector<2x128xf32> -> vector<2x128xf32>
      %19 = arith.addf %15, %18 : vector<2x128xf32>
      %20 = tpu.iota {dimensions = array<i32: 1>} : vector<2x128xi32>
      %c64_i32 = arith.constant 64 : i32
      %21 = vector.broadcast %c64_i32 : i32 to vector<2x128xi32>
      %22 = arith.cmpi sge, %20, %21 : vector<2x128xi32>
      %c96_i32 = arith.constant 96 : i32
      %23 = vector.broadcast %c96_i32 : i32 to vector<2x128xi32>
      %24 = arith.cmpi slt, %20, %23 : vector<2x128xi32>
      %25 = arith.andi %22, %24 : vector<2x128xi1>
      %cst_19 = arith.constant 2.000000e+00 : f32
      %26 = vector.broadcast %cst_19 : f32 to vector<2x128xf32>
      %27 = arith.mulf %26, %19 : vector<2x128xf32>
      %28 = arith.select %25, %27, %19 : vector<2x128xi1>, vector<2x128xf32>
      %29 = arith.negf %28 : vector<2x128xf32>
      %30 = math.exp %29 : vector<2x128xf32>
      %cst_20 = arith.constant 1.000000e+00 : f32
      %31 = vector.broadcast %cst_20 : f32 to vector<2x128xf32>
      %32 = arith.addf %31, %30 : vector<2x128xf32>
      %33 = arith.divf %31, %32 : vector<2x128xf32>
      %cst_21 = arith.constant 2.000000e+00 : f32
      %34 = vector.broadcast %cst_21 : f32 to vector<2x128xf32>
      %35 = arith.mulf %34, %33 : vector<2x128xf32>
      %cst_22 = arith.constant 1.000000e+00 : f32
      %36 = vector.broadcast %cst_22 : f32 to vector<2x128xf32>
      %37 = arith.subf %35, %36 : vector<2x128xf32>
      %38 = arith.select %25, %37, %33 : vector<2x128xi1>, vector<2x128xf32>
      %39 = vector.extract_strided_slice %38 {offsets = [0, 0], sizes = [2, 32], strides = [1, 1]} : vector<2x128xf32> to vector<2x32xf32>
      %40 = vector.extract_strided_slice %38 {offsets = [0, 32], sizes = [2, 32], strides = [1, 1]} : vector<2x128xf32> to vector<2x32xf32>
      %41 = vector.extract_strided_slice %38 {offsets = [0, 64], sizes = [2, 32], strides = [1, 1]} : vector<2x128xf32> to vector<2x32xf32>
      %42 = vector.extract_strided_slice %38 {offsets = [0, 96], sizes = [2, 32], strides = [1, 1]} : vector<2x128xf32> to vector<2x32xf32>
      %43 = arith.mulf %40, %14 : vector<2x32xf32>
      %44 = arith.mulf %39, %41 : vector<2x32xf32>
      %45 = arith.addf %43, %44 : vector<2x32xf32>
      %46 = math.tanh %45 : vector<2x32xf32>
      %47 = arith.mulf %42, %46 : vector<2x32xf32>
      %c0_23 = arith.constant 0 : index
      %c0_24 = arith.constant 0 : index
      %48 = vector.load %arg7[%c0_23, %c0_24] : memref<1x32xf32, #tpu.memory_space<vmem>>, vector<1x32xf32>
      %49 = vector.broadcast %48 : vector<1x32xf32> to vector<2x32xf32>
      %50 = arith.mulf %47, %49 : vector<2x32xf32>
      %cst_25 = arith.constant dense<0.000000e+00> : vector<2xf32>
      %51 = vector.multi_reduction <add>, %50, %cst_25 [1] : vector<2x32xf32> to vector<2xf32>
      %52 = vector.shape_cast %51 : vector<2xf32> to vector<2x1xf32>
      %c0_26 = arith.constant 0 : index
      %c0_27 = arith.constant 0 : index
      %53 = memref.load %arg8[%c0_26, %c0_27] : memref<1x1xf32, #tpu.memory_space<smem>>
      %54 = vector.broadcast %53 : f32 to vector<2x1xf32>
      %55 = arith.addf %52, %54 : vector<2x1xf32>
      %56 = arith.negf %55 : vector<2x1xf32>
      %57 = math.exp %56 : vector<2x1xf32>
      %cst_28 = arith.constant 1.000000e+00 : f32
      %58 = vector.broadcast %cst_28 : f32 to vector<2x1xf32>
      %59 = arith.addf %58, %57 : vector<2x1xf32>
      %60 = arith.divf %58, %59 : vector<2x1xf32>
      %c0_29 = arith.constant 0 : index
      %c0_30 = arith.constant 0 : index
      %61 = vector.load %arg9[%c0_29, %c0_30] : memref<2x1xf32, #tpu.memory_space<vmem>>, vector<2x1xf32>
      tpu.vector_store %arg9[%c0_29, %c0_30], %60 {strides = array<i32>} : memref<2x1xf32, #tpu.memory_space<vmem>>, vector<2x1xf32>,
      %c0_31 = arith.constant 0 : index
      %c0_32 = arith.constant 0 : index
      %62 = vector.load %arg10[%c0_31, %c0_32] : memref<2x32xf32, #tpu.memory_space<vmem>>, vector<2x32xf32>
      tpu.vector_store %arg10[%c0_31, %c0_32], %47 {strides = array<i32>} : memref<2x32xf32, #tpu.memory_space<vmem>>, vector<2x32xf32>,
      %c0_33 = arith.constant 0 : index
      %c0_34 = arith.constant 0 : index
      %63 = vector.load %arg11[%c0_33, %c0_34] : memref<2x32xf32, #tpu.memory_space<vmem>>, vector<2x32xf32>
      tpu.vector_store %arg11[%c0_33, %c0_34], %45 {strides = array<i32>} : memref<2x32xf32, #tpu.memory_space<vmem>>, vector<2x32xf32>,
    } else {
    }
    return
  }
  func.func @transform_0(%arg0: i32) -> (i32, i32) {
    %c0_i32 = arith.constant 0 : i32
    %c0_i32_0 = arith.constant 0 : i32
    return %c0_i32, %arg0 : i32, i32
  }
  func.func @transform_1(%arg0: i32) -> (i32, i32) {
    %c0_i32 = arith.constant 0 : i32
    %c0_i32_0 = arith.constant 0 : i32
    return %arg0, %c0_i32 : i32, i32
  }
  func.func @transform_2(%arg0: i32) -> (i32, i32) {
    %c0_i32 = arith.constant 0 : i32
    %c0_i32_0 = arith.constant 0 : i32
    %c0_i32_1 = arith.constant 0 : i32
    return %c0_i32, %c0_i32_0 : i32, i32
  }
  func.func @transform_3(%arg0: i32) -> (i32, i32) {
    %c0_i32 = arith.constant 0 : i32
    %c0_i32_0 = arith.constant 0 : i32
    %c0_i32_1 = arith.constant 0 : i32
    return %c0_i32, %c0_i32_0 : i32, i32
  }
  func.func @transform_4(%arg0: i32) -> (i32, i32) {
    %c0_i32 = arith.constant 0 : i32
    %c0_i32_0 = arith.constant 0 : i32
    %c0_i32_1 = arith.constant 0 : i32
    return %c0_i32, %c0_i32_0 : i32, i32
  }
  func.func @transform_5(%arg0: i32) -> (i32, i32) {
    %c0_i32 = arith.constant 0 : i32
    %c0_i32_0 = arith.constant 0 : i32
    %c0_i32_1 = arith.constant 0 : i32
    return %c0_i32, %c0_i32_0 : i32, i32
  }
  func.func @transform_6(%arg0: i32) -> (i32, i32) {
    %c0_i32 = arith.constant 0 : i32
    %c0_i32_0 = arith.constant 0 : i32
    %c0_i32_1 = arith.constant 0 : i32
    return %c0_i32, %c0_i32_0 : i32, i32
  }
  func.func @transform_7(%arg0: i32) -> (i32, i32) {
    %c0_i32 = arith.constant 0 : i32
    %c0_i32_0 = arith.constant 0 : i32
    %c0_i32_1 = arith.constant 0 : i32
    return %c0_i32, %c0_i32_0 : i32, i32
  }
  func.func @transform_8(%arg0: i32) -> (i32, i32) {
    %c0_i32 = arith.constant 0 : i32
    %c0_i32_0 = arith.constant 0 : i32
    %c0_i32_1 = arith.constant 0 : i32
    return %c0_i32, %c0_i32_0 : i32, i32
  }
  func.func @transform_9(%arg0: i32) -> (i32, i32) {
    %c0_i32 = arith.constant 0 : i32
    %c0_i32_0 = arith.constant 0 : i32
    %c0_i32_1 = arith.constant 0 : i32
    return %c0_i32, %c0_i32_0 : i32, i32
  }
  func.func @transform_10(%arg0: i32) -> (i32, i32) {
    %c0_i32 = arith.constant 0 : i32
    %c0_i32_0 = arith.constant 0 : i32
    %c0_i32_1 = arith.constant 0 : i32
    return %c0_i32, %c0_i32_0 : i32, i32
  }
}

</mosaic_0001>

<llo_original>
// kernel: _soft_rnn_gate_jit.1
$region0: #{_soft_rnn_gate_jit.1}
  #allocation0 [shape = 'u32[]', space=smem, size = 0x4, offset = 0x4, fixed_abs, tag = 'smem constant byte address 0x4 - core index']
  #allocation1 [shape = 'u32[144,128]{1,0:T(1,128)}', space=vmem, size = 0x12000, scoped, tag = 'internal scratch']
  #allocation2 [shape = 'f32[2,128]{1,0:T(2,128)}', space=vmem, size = 0x400, scoped, tag = 'scratch operand']
  #allocation3 [shape = 'f32[1,1]{1,0:T(1,128)S(6)}', space=smem, size = 0x200, scoped, tag = 'scoped memory for _soft_rnn_gate_jit.1']
  %s0 = inlined_call_operand.vmem [shape: f32[2,1024], index: 0, kind: input, shape index: {}]
  %s1 = inlined_call_operand.hbm [shape: bf16[1024,128], index: 1, kind: input, shape index: {}]
  %s2 = inlined_call_operand.vmem [shape: f32[2,32], index: 2, kind: input, shape index: {}]
  %s3 = inlined_call_operand.vmem [shape: f32[2,32], index: 3, kind: input, shape index: {}]
  %s4 = inlined_call_operand.vmem [shape: bf16[32,128], index: 4, kind: input, shape index: {}]
  %s5 = inlined_call_operand.vmem [shape: f32[1,128], index: 5, kind: input, shape index: {}]
  %s6 = inlined_call_operand.vmem [shape: f32[1,32], index: 6, kind: input, shape index: {}]
  %s7 = inlined_call_operand.<no memory space> [shape: f32[1,1], index: 7, kind: input, shape index: {}]
  %s8 = inlined_call_operand.vmem [shape: f32[2,1], index: 8, kind: output, shape index: {0}]
  %s9 = inlined_call_operand.hbm [shape: f32[2,32], index: 9, kind: output, shape index: {1}]
  %s10 = inlined_call_operand.hbm [shape: f32[2,32], index: 10, kind: output, shape index: {2}]
  %11 = xla_tuple %s8, %s9, %s10
  %s12 = sld [smem:[#allocation0]]
  $region70: #{_soft_rnn_gate_jit.1} parent=0
    _
  %s14 = ssub.s32 1, %s12
  %s15 = scalar_select 0, %s14, %s12
  %16 = sst [smem:[#allocation3]] %s7
  $region1: #{_soft_rnn_gate_jit.1} parent=0
    #allocation4 [shape = 'u8[262144]{0}', space=vmem, size = 0x40000, scoped, tag = 'input window, operand 1, single buffered']
    #allocation5 [shape = 's32[1]{0}', space=sflag, size = 0x4, scoped, tag = 'scoped memory for _soft_rnn_gate_jit.1']
    #allocation6 [shape = 's32[1]{0}', space=sflag, size = 0x4, scoped, tag = 'scoped memory for _soft_rnn_gate_jit.1']
    #allocation7 [shape = 'u8[1024]{0}', space=vmem, size = 0x400, scoped, tag = 'output window, operand 1, single buffered']
    #allocation8 [shape = 'u8[1024]{0}', space=vmem, size = 0x400, scoped, tag = 'output window, operand 2, single buffered']
    #allocation9 [shape = 's32[1]{0}', space=sflag, size = 0x4, scoped, tag = 'scoped memory for _soft_rnn_gate_jit.1']
    %17 = vsyncpa [#allocation5], 0
    %18 = vsyncpa [#allocation6], 0
    %19 = vsyncpa [#allocation9], 0
    // Predicated region
    $region2: #{_soft_rnn_gate_jit.1} parent=1 // pred_check
      _
    $region3: #{_soft_rnn_gate_jit.1} parent=1 // pred_check_branch
      %21 = sbr.rel (0) target = $region5
    $region4: #{_soft_rnn_gate_jit.1} parent=1 // pred_region
      _
    $region5: #{_soft_rnn_gate_jit.1} parent=1 // pred_fallthru
      _
    // Predicated region
    $region6: #{_soft_rnn_gate_jit.1} parent=1 // pred_check
      _
    $region7: #{_soft_rnn_gate_jit.1} parent=1 // pred_check_branch
      %23 = sbr.rel (0) target = $region9
    $region8: #{_soft_rnn_gate_jit.1} parent=1 // pred_region
      %s25 = ssub.s32 8192, 8192
      %26 = vsyncadd [#allocation5], %s25
      %s27 = sshll.u32 [#allocation4], 4
      %s28 = int_to_ptr.vmem [resolvable:$true] %s27
      %33 = dma.hbm_to_vmem [thread:$0]  %s1, 8192, %s28, [#allocation5], 64, 64, 4
    $region9: #{_soft_rnn_gate_jit.1} parent=1 // pred_fallthru
      _
    // Predicated region
    $region10: #{_soft_rnn_gate_jit.1} parent=1 // pred_check
      _
    $region11: #{_soft_rnn_gate_jit.1} parent=1 // pred_check_branch
      %35 = sbr.rel (0) target = $region13
    $region12: #{_soft_rnn_gate_jit.1} parent=1 // pred_region
      _
    $region13: #{_soft_rnn_gate_jit.1} parent=1 // pred_fallthru
      _
    // Predicated region
    $region14: #{_soft_rnn_gate_jit.1} parent=1 // pred_check
      _
    $region15: #{_soft_rnn_gate_jit.1} parent=1 // pred_check_branch
      %37 = sbr.rel (0) target = $region17
    $region16: #{_soft_rnn_gate_jit.1} parent=1 // pred_region
      _
    $region17: #{_soft_rnn_gate_jit.1} parent=1 // pred_fallthru
      _
    // Predicated region
    $region18: #{_soft_rnn_gate_jit.1} parent=1 // pred_check
      _
    $region19: #{_soft_rnn_gate_jit.1} parent=1 // pred_check_branch
      %39 = sbr.rel (0) target = $region21
    $region20: #{_soft_rnn_gate_jit.1} parent=1 // pred_region
      _
    $region21: #{_soft_rnn_gate_jit.1} parent=1 // pred_fallthru
      _
    // Predicated region
    $region22: #{_soft_rnn_gate_jit.1} parent=1 // pred_check
      _
    $region23: #{_soft_rnn_gate_jit.1} parent=1 // pred_check_branch
      %41 = sbr.rel (0) target = $region25
    $region24: #{_soft_rnn_gate_jit.1} parent=1 // pred_region
      _
    $region25: #{_soft_rnn_gate_jit.1} parent=1 // pred_fallthru
      _
    // Predicated region
    $region26: #{_soft_rnn_gate_jit.1} parent=1 // pred_check
      _
    $region27: #{_soft_rnn_gate_jit.1} parent=1 // pred_check_branch
      %43 = sbr.rel (0) target = $region29
    $region28: #{_soft_rnn_gate_jit.1} parent=1 // pred_region
      _
    $region29: #{_soft_rnn_gate_jit.1} parent=1 // pred_fallthru
      _
    // Predicated region
    $region30: #{_soft_rnn_gate_jit.1} parent=1 // pred_check
      _
    $region31: #{_soft_rnn_gate_jit.1} parent=1 // pred_check_branch
      %45 = sbr.rel (0) target = $region33
    $region32: #{_soft_rnn_gate_jit.1} parent=1 // pred_region
      _
    $region33: #{_soft_rnn_gate_jit.1} parent=1 // pred_fallthru
      _
    // Predicated region
    $region34: #{_soft_rnn_gate_jit.1} parent=1 // pred_check
      _
    $region35: #{_soft_rnn_gate_jit.1} parent=1 // pred_check_branch
      %47 = sbr.rel (0) target = $region37
    $region36: #{_soft_rnn_gate_jit.1} parent=1 // pred_region
      %48 = dma.done [#allocation5], 8192
    $region37: #{_soft_rnn_gate_jit.1} parent=1 // pred_fallthru
      _
    %p50 = scmp.eq.s32.totalorder 0, 0
    // Predicated region
    $region38: #{_soft_rnn_gate_jit.1} parent=1 // pred_check
      %p51 = pneg %p50
    $region39: #{_soft_rnn_gate_jit.1} parent=1 // pred_check_branch
      %53 = sbr.rel (%p51) target = $region41
    $region40: #{_soft_rnn_gate_jit.1} parent=1 // pred_region
      %v54 = vld [vmem:[%s5] sm:$0x1]
      %v56 = vlaneseq
      %v57 = vshrl.u32 %v56, 7
      %v58 = vsub.s32 0, %v57
      %v59 = vrot.slane %v54, %v58
      %61 = vst [vmem:[#allocation2] sm:$0x3] %v59
    $region41: #{_soft_rnn_gate_jit.1} parent=1 // pred_fallthru
      _
    %v62 = vld [vmem:[#allocation2] sm:$0x3]
    %v63 = vld [vmem:[%s0] sm:$0xff]
    %v64 = vld [vmem:[%s0 + $0x8] sm:$0xff]
    %v67 = vcombine.high %v63, %v63
    %v69 = vunpack.c.l.s4 1983009808
    %v70 = vunpack.c.0.s8 %v69
    %v71 = vlaneseq
    %v72 = vshrl.u32 %v71, 7
    %v73 = vsub.s32 %v70, %v72
    %v74 = vrot.slane %v63, %v73
    %v76 = vunpack.c.l.s4 1983009808
    %v77 = vunpack.c.0.s8 %v76
    %v78 = vlaneseq
    %v79 = vshrl.u32 %v78, 7
    %v80 = vsub.s32 %v77, %v79
    %v81 = vrot.slane %v67, %v80
    %v82 = vcombine.high %v74, %v74
    %v83 = vcombine.high %v81, %v81
    %v84 = vcombine.high %v64, %v64
    %v86 = vunpack.c.l.s4 1983009808
    %v87 = vunpack.c.0.s8 %v86
    %v88 = vlaneseq
    %v89 = vshrl.u32 %v88, 7
    %v90 = vsub.s32 %v87, %v89
    %v91 = vrot.slane %v64, %v90
    %v93 = vunpack.c.l.s4 1983009808
    %v94 = vunpack.c.0.s8 %v93
    %v95 = vlaneseq
    %v96 = vshrl.u32 %v95, 7
    %v97 = vsub.s32 %v94, %v96
    %v98 = vrot.slane %v84, %v97
    %v99 = vcombine.high %v91, %v91
    %v100 = vcombine.high %v98, %v98
    %v109 = vpack.c.bf16 %v74, %v74
    %v110 = vpack.c.bf16 %v82, %v82
    %v111 = vpack.c.bf16 %v81, %v81
    %v112 = vpack.c.bf16 %v83, %v83
    %v113 = vpack.c.bf16 %v91, %v91
    %v114 = vpack.c.bf16 %v99, %v99
    %v115 = vpack.c.bf16 %v98, %v98
    %v116 = vpack.c.bf16 %v100, %v100
    %v117 = vld [vmem:[#allocation4] sm:$0xf]
    %v118 = vld [vmem:[#allocation4 + $0x4] sm:$0xf]
    %v119 = vld [vmem:[#allocation4 + $0x8] sm:$0xf]
    %v120 = vld [vmem:[#allocation4 + $0xc] sm:$0xf]
    %v121 = vld [vmem:[#allocation4 + $0x10] sm:$0xf]
    %v122 = vld [vmem:[#allocation4 + $0x14] sm:$0xf]
    %v123 = vld [vmem:[#allocation4 + $0x18] sm:$0xf]
    %v124 = vld [vmem:[#allocation4 + $0x1c] sm:$0xf]
    %v125 = vld [vmem:[#allocation4 + $0x20] sm:$0xf]
    %v126 = vld [vmem:[#allocation4 + $0x24] sm:$0xf]
    %v127 = vld [vmem:[#allocation4 + $0x28] sm:$0xf]
    %v128 = vld [vmem:[#allocation4 + $0x2c] sm:$0xf]
    %v129 = vld [vmem:[#allocation4 + $0x30] sm:$0xf]
    %v130 = vld [vmem:[#allocation4 + $0x34] sm:$0xf]
    %v131 = vld [vmem:[#allocation4 + $0x38] sm:$0xf]
    %v132 = vld [vmem:[#allocation4 + $0x3c] sm:$0xf]
    %v133 = vld [vmem:[#allocation4 + $0x40] sm:$0xf]
    %v134 = vld [vmem:[#allocation4 + $0x44] sm:$0xf]
    %v135 = vld [vmem:[#allocation4 + $0x48] sm:$0xf]
    %v136 = vld [vmem:[#allocation4 + $0x4c] sm:$0xf]
    %v137 = vld [vmem:[#allocation4 + $0x50] sm:$0xf]
    %v138 = vld [vmem:[#allocation4 + $0x54] sm:$0xf]
    %v139 = vld [vmem:[#allocation4 + $0x58] sm:$0xf]
    %v140 = vld [vmem:[#allocation4 + $0x5c] sm:$0xf]
    %v141 = vld [vmem:[#allocation4 + $0x60] sm:$0xf]
    %v142 = vld [vmem:[#allocation4 + $0x64] sm:$0xf]
    %v143 = vld [vmem:[#allocation4 + $0x68] sm:$0xf]
    %v144 = vld [vmem:[#allocation4 + $0x6c] sm:$0xf]
    %v145 = vld [vmem:[#allocation4 + $0x70] sm:$0xf]
    %v146 = vld [vmem:[#allocation4 + $0x74] sm:$0xf]
    %v147 = vld [vmem:[#allocation4 + $0x78] sm:$0xf]
    %v148 = vld [vmem:[#allocation4 + $0x7c] sm:$0xf]
    %v149 = vld [vmem:[#allocation4 + $0x80] sm:$0xf]
    %v150 = vld [vmem:[#allocation4 + $0x84] sm:$0xf]
    %v151 = vld [vmem:[#allocation4 + $0x88] sm:$0xf]
    %v152 = vld [vmem:[#allocation4 + $0x8c] sm:$0xf]
    %v153 = vld [vmem:[#allocation4 + $0x90] sm:$0xf]
    %v154 = vld [vmem:[#allocation4 + $0x94] sm:$0xf]
    %v155 = vld [vmem:[#allocation4 + $0x98] sm:$0xf]
    %v156 = vld [vmem:[#allocation4 + $0x9c] sm:$0xf]
    %v157 = vld [vmem:[#allocation4 + $0xa0] sm:$0xf]
    %v158 = vld [vmem:[#allocation4 + $0xa4] sm:$0xf]
    %v159 = vld [vmem:[#allocation4 + $0xa8] sm:$0xf]
    %v160 = vld [vmem:[#allocation4 + $0xac] sm:$0xf]
    %v161 = vld [vmem:[#allocation4 + $0xb0] sm:$0xf]
    %v162 = vld [vmem:[#allocation4 + $0xb4] sm:$0xf]
    %v163 = vld [vmem:[#allocation4 + $0xb8] sm:$0xf]
    %v164 = vld [vmem:[#allocation4 + $0xbc] sm:$0xf]
    %v165 = vld [vmem:[#allocation4 + $0xc0] sm:$0xf]
    %v166 = vld [vmem:[#allocation4 + $0xc4] sm:$0xf]
    %v167 = vld [vmem:[#allocation4 + $0xc8] sm:$0xf]
    %v168 = vld [vmem:[#allocation4 + $0xcc] sm:$0xf]
    %v169 = vld [vmem:[#allocation4 + $0xd0] sm:$0xf]
    %v170 = vld [vmem:[#allocation4 + $0xd4] sm:$0xf]
    %v171 = vld [vmem:[#allocation4 + $0xd8] sm:$0xf]
    %v172 = vld [vmem:[#allocation4 + $0xdc] sm:$0xf]
    %v173 = vld [vmem:[#allocation4 + $0xe0] sm:$0xf]
    %v174 = vld [vmem:[#allocation4 + $0xe4] sm:$0xf]
    %v175 = vld [vmem:[#allocation4 + $0xe8] sm:$0xf]
    %v176 = vld [vmem:[#allocation4 + $0xec] sm:$0xf]
    %v177 = vld [vmem:[#allocation4 + $0xf0] sm:$0xf]
    %v178 = vld [vmem:[#allocation4 + $0xf4] sm:$0xf]
    %v179 = vld [vmem:[#allocation4 + $0xf8] sm:$0xf]
    %v180 = vld [vmem:[#allocation4 + $0xfc] sm:$0xf]
    %v181 = vld [vmem:[#allocation4 + $0x100] sm:$0xf]
    %v182 = vld [vmem:[#allocation4 + $0x104] sm:$0xf]
    %v183 = vld [vmem:[#allocation4 + $0x108] sm:$0xf]
    %v184 = vld [vmem:[#allocation4 + $0x10c] sm:$0xf]
    %v185 = vld [vmem:[#allocation4 + $0x110] sm:$0xf]
    %v186 = vld [vmem:[#allocation4 + $0x114] sm:$0xf]
    %v187 = vld [vmem:[#allocation4 + $0x118] sm:$0xf]
    %v188 = vld [vmem:[#allocation4 + $0x11c] sm:$0xf]
    %v189 = vld [vmem:[#allocation4 + $0x120] sm:$0xf]
    %v190 = vld [vmem:[#allocation4 + $0x124] sm:$0xf]
    %v191 = vld [vmem:[#allocation4 + $0x128] sm:$0xf]
    %v192 = vld [vmem:[#allocation4 + $0x12c] sm:$0xf]
    %v193 = vld [vmem:[#allocation4 + $0x130] sm:$0xf]
    %v194 = vld [vmem:[#allocation4 + $0x134] sm:$0xf]
    %v195 = vld [vmem:[#allocation4 + $0x138] sm:$0xf]
    %v196 = vld [vmem:[#allocation4 + $0x13c] sm:$0xf]
    %v197 = vld [vmem:[#allocation4 + $0x140] sm:$0xf]
    %v198 = vld [vmem:[#allocation4 + $0x144] sm:$0xf]
    %v199 = vld [vmem:[#allocation4 + $0x148] sm:$0xf]
    %v200 = vld [vmem:[#allocation4 + $0x14c] sm:$0xf]
    %v201 = vld [vmem:[#allocation4 + $0x150] sm:$0xf]
    %v202 = vld [vmem:[#allocation4 + $0x154] sm:$0xf]
    %v203 = vld [vmem:[#allocation4 + $0x158] sm:$0xf]
    %v204 = vld [vmem:[#allocation4 + $0x15c] sm:$0xf]
    %v205 = vld [vmem:[#allocation4 + $0x160] sm:$0xf]
    %v206 = vld [vmem:[#allocation4 + $0x164] sm:$0xf]
    %v207 = vld [vmem:[#allocation4 + $0x168] sm:$0xf]
    %v208 = vld [vmem:[#allocation4 + $0x16c] sm:$0xf]
    %v209 = vld [vmem:[#allocation4 + $0x170] sm:$0xf]
    %v210 = vld [vmem:[#allocation4 + $0x174] sm:$0xf]
    %v211 = vld [vmem:[#allocation4 + $0x178] sm:$0xf]
    %v212 = vld [vmem:[#allocation4 + $0x17c] sm:$0xf]
    %v213 = vld [vmem:[#allocation4 + $0x180] sm:$0xf]
    %v214 = vld [vmem:[#allocation4 + $0x184] sm:$0xf]
    %v215 = vld [vmem:[#allocation4 + $0x188] sm:$0xf]
    %v216 = vld [vmem:[#allocation4 + $0x18c] sm:$0xf]
    %v217 = vld [vmem:[#allocation4 + $0x190] sm:$0xf]
    %v218 = vld [vmem:[#allocation4 + $0x194] sm:$0xf]
    %v219 = vld [vmem:[#allocation4 + $0x198] sm:$0xf]
    %v220 = vld [vmem:[#allocation4 + $0x19c] sm:$0xf]
    %v221 = vld [vmem:[#allocation4 + $0x1a0] sm:$0xf]
    %v222 = vld [vmem:[#allocation4 + $0x1a4] sm:$0xf]
    %v223 = vld [vmem:[#allocation4 + $0x1a8] sm:$0xf]
    %v224 = vld [vmem:[#allocation4 + $0x1ac] sm:$0xf]
    %v225 = vld [vmem:[#allocation4 + $0x1b0] sm:$0xf]
    %v226 = vld [vmem:[#allocation4 + $0x1b4] sm:$0xf]
    %v227 = vld [vmem:[#allocation4 + $0x1b8] sm:$0xf]
    %v228 = vld [vmem:[#allocation4 + $0x1bc] sm:$0xf]
    %v229 = vld [vmem:[#allocation4 + $0x1c0] sm:$0xf]
    %v230 = vld [vmem:[#allocation4 + $0x1c4] sm:$0xf]
    %v231 = vld [vmem:[#allocation4 + $0x1c8] sm:$0xf]
    %v232 = vld [vmem:[#allocation4 + $0x1cc] sm:$0xf]
    %v233 = vld [vmem:[#allocation4 + $0x1d0] sm:$0xf]
    %v234 = vld [vmem:[#allocation4 + $0x1d4] sm:$0xf]
    %v235 = vld [vmem:[#allocation4 + $0x1d8] sm:$0xf]
    %v236 = vld [vmem:[#allocation4 + $0x1dc] sm:$0xf]
    %v237 = vld [vmem:[#allocation4 + $0x1e0] sm:$0xf]
    %v238 = vld [vmem:[#allocation4 + $0x1e4] sm:$0xf]
    %v239 = vld [vmem:[#allocation4 + $0x1e8] sm:$0xf]
    %v240 = vld [vmem:[#allocation4 + $0x1ec] sm:$0xf]
    %v241 = vld [vmem:[#allocation4 + $0x1f0] sm:$0xf]
    %v242 = vld [vmem:[#allocation4 + $0x1f4] sm:$0xf]
    %v243 = vld [vmem:[#allocation4 + $0x1f8] sm:$0xf]
    %v244 = vld [vmem:[#allocation4 + $0x1fc] sm:$0xf]
    %v373 = vunpack.c.l.b16 %v117
    %v374 = vunpack.c.l.b16 %v118
    %v375 = vunpack.c.l.b16 %v119
    %v376 = vunpack.c.l.b16 %v120
    %v377 = vunpack.c.l.b16 %v121
    %v378 = vunpack.c.l.b16 %v122
    %v379 = vunpack.c.l.b16 %v123
    %v380 = vunpack.c.l.b16 %v124
    %v381 = vunpack.c.l.b16 %v125
    %v382 = vunpack.c.l.b16 %v126
    %v383 = vunpack.c.l.b16 %v127
    %v384 = vunpack.c.l.b16 %v128
    %v385 = vunpack.c.l.b16 %v129
    %v386 = vunpack.c.l.b16 %v130
    %v387 = vunpack.c.l.b16 %v131
    %v388 = vunpack.c.l.b16 %v132
    %v389 = vunpack.c.l.b16 %v133
    %v390 = vunpack.c.l.b16 %v134
    %v391 = vunpack.c.l.b16 %v135
    %v392 = vunpack.c.l.b16 %v136
    %v393 = vunpack.c.l.b16 %v137
    %v394 = vunpack.c.l.b16 %v138
    %v395 = vunpack.c.l.b16 %v139
    %v396 = vunpack.c.l.b16 %v140
    %v397 = vunpack.c.l.b16 %v141
    %v398 = vunpack.c.l.b16 %v142
    %v399 = vunpack.c.l.b16 %v143
    %v400 = vunpack.c.l.b16 %v144
    %v401 = vunpack.c.l.b16 %v145
    %v402 = vunpack.c.l.b16 %v146
    %v403 = vunpack.c.l.b16 %v147
    %v404 = vunpack.c.l.b16 %v148
    %v405 = vunpack.c.l.b16 %v149
    %v406 = vunpack.c.l.b16 %v150
    %v407 = vunpack.c.l.b16 %v151
    %v408 = vunpack.c.l.b16 %v152
    %v409 = vunpack.c.l.b16 %v153
    %v410 = vunpack.c.l.b16 %v154
    %v411 = vunpack.c.l.b16 %v155
    %v412 = vunpack.c.l.b16 %v156
    %v413 = vunpack.c.l.b16 %v157
    %v414 = vunpack.c.l.b16 %v158
    %v415 = vunpack.c.l.b16 %v159
    %v416 = vunpack.c.l.b16 %v160
    %v417 = vunpack.c.l.b16 %v161
    %v418 = vunpack.c.l.b16 %v162
    %v419 = vunpack.c.l.b16 %v163
    %v420 = vunpack.c.l.b16 %v164
    %v421 = vunpack.c.l.b16 %v165
    %v422 = vunpack.c.l.b16 %v166
    %v423 = vunpack.c.l.b16 %v167
    %v424 = vunpack.c.l.b16 %v168
    %v425 = vunpack.c.l.b16 %v169
    %v426 = vunpack.c.l.b16 %v170
    %v427 = vunpack.c.l.b16 %v171
    %v428 = vunpack.c.l.b16 %v172
    %v429 = vunpack.c.l.b16 %v173
    %v430 = vunpack.c.l.b16 %v174
    %v431 = vunpack.c.l.b16 %v175
    %v432 = vunpack.c.l.b16 %v176
    %v433 = vunpack.c.l.b16 %v177
    %v434 = vunpack.c.l.b16 %v178
    %v435 = vunpack.c.l.b16 %v179
    %v436 = vunpack.c.l.b16 %v180
    %v437 = vunpack.c.l.b16 %v181
    %v438 = vunpack.c.l.b16 %v182
    %v439 = vunpack.c.l.b16 %v183
    %v440 = vunpack.c.l.b16 %v184
    %v441 = vunpack.c.l.b16 %v185
    %v442 = vunpack.c.l.b16 %v186
    %v443 = vunpack.c.l.b16 %v187
    %v444 = vunpack.c.l.b16 %v188
    %v445 = vunpack.c.l.b16 %v189
    %v446 = vunpack.c.l.b16 %v190
    %v447 = vunpack.c.l.b16 %v191
    %v448 = vunpack.c.l.b16 %v192
    %v449 = vunpack.c.l.b16 %v193
    %v450 = vunpack.c.l.b16 %v194
    %v451 = vunpack.c.l.b16 %v195
    %v452 = vunpack.c.l.b16 %v196
    %v453 = vunpack.c.l.b16 %v197
    %v454 = vunpack.c.l.b16 %v198
    %v455 = vunpack.c.l.b16 %v199
    %v456 = vunpack.c.l.b16 %v200
    %v457 = vunpack.c.l.b16 %v201
    %v458 = vunpack.c.l.b16 %v202
    %v459 = vunpack.c.l.b16 %v203
    %v460 = vunpack.c.l.b16 %v204
    %v461 = vunpack.c.l.b16 %v205
    %v462 = vunpack.c.l.b16 %v206
    %v463 = vunpack.c.l.b16 %v207
    %v464 = vunpack.c.l.b16 %v208
    %v465 = vunpack.c.l.b16 %v209
    %v466 = vunpack.c.l.b16 %v210
    %v467 = vunpack.c.l.b16 %v211
    %v468 = vunpack.c.l.b16 %v212
    %v469 = vunpack.c.l.b16 %v213
    %v470 = vunpack.c.l.b16 %v214
    %v471 = vunpack.c.l.b16 %v215
    %v472 = vunpack.c.l.b16 %v216
    %v473 = vunpack.c.l.b16 %v217
    %v474 = vunpack.c.l.b16 %v218
    %v475 = vunpack.c.l.b16 %v219
    %v476 = vunpack.c.l.b16 %v220
    %v477 = vunpack.c.l.b16 %v221
    %v478 = vunpack.c.l.b16 %v222
    %v479 = vunpack.c.l.b16 %v223
    %v480 = vunpack.c.l.b16 %v224
    %v481 = vunpack.c.l.b16 %v225
    %v482 = vunpack.c.l.b16 %v226
    %v483 = vunpack.c.l.b16 %v227
    %v484 = vunpack.c.l.b16 %v228
    %v485 = vunpack.c.l.b16 %v229
    %v486 = vunpack.c.l.b16 %v230
    %v487 = vunpack.c.l.b16 %v231
    %v488 = vunpack.c.l.b16 %v232
    %v489 = vunpack.c.l.b16 %v233
    %v490 = vunpack.c.l.b16 %v234
    %v491 = vunpack.c.l.b16 %v235
    %v492 = vunpack.c.l.b16 %v236
    %v493 = vunpack.c.l.b16 %v237
    %v494 = vunpack.c.l.b16 %v238
    %v495 = vunpack.c.l.b16 %v239
    %v496 = vunpack.c.l.b16 %v240
    %v497 = vunpack.c.l.b16 %v241
    %v498 = vunpack.c.l.b16 %v242
    %v499 = vunpack.c.l.b16 %v243
    %v500 = vunpack.c.l.b16 %v244
    %v501 = vpack.c.b16 %v374, %v373
    %v502 = vpack.c.b16 %v376, %v375
    %v503 = vpack.c.b16 %v378, %v377
    %v504 = vpack.c.b16 %v380, %v379
    %v505 = vpack.c.b16 %v382, %v381
    %v506 = vpack.c.b16 %v384, %v383
    %v507 = vpack.c.b16 %v386, %v385
    %v508 = vpack.c.b16 %v388, %v387
    %v509 = vpack.c.b16 %v390, %v389
    %v510 = vpack.c.b16 %v392, %v391
    %v511 = vpack.c.b16 %v394, %v393
    %v512 = vpack.c.b16 %v396, %v395
    %v513 = vpack.c.b16 %v398, %v397
    %v514 = vpack.c.b16 %v400, %v399
    %v515 = vpack.c.b16 %v402, %v401
    %v516 = vpack.c.b16 %v404, %v403
    %v517 = vpack.c.b16 %v406, %v405
    %v518 = vpack.c.b16 %v408, %v407
    %v519 = vpack.c.b16 %v410, %v409
    %v520 = vpack.c.b16 %v412, %v411
    %v521 = vpack.c.b16 %v414, %v413
    %v522 = vpack.c.b16 %v416, %v415
    %v523 = vpack.c.b16 %v418, %v417
    %v524 = vpack.c.b16 %v420, %v419
    %v525 = vpack.c.b16 %v422, %v421
    %v526 = vpack.c.b16 %v424, %v423
    %v527 = vpack.c.b16 %v426, %v425
    %v528 = vpack.c.b16 %v428, %v427
    %v529 = vpack.c.b16 %v430, %v429
    %v530 = vpack.c.b16 %v432, %v431
    %v531 = vpack.c.b16 %v434, %v433
    %v532 = vpack.c.b16 %v436, %v435
    %v533 = vpack.c.b16 %v438, %v437
    %v534 = vpack.c.b16 %v440, %v439
    %v535 = vpack.c.b16 %v442, %v441
    %v536 = vpack.c.b16 %v444, %v443
    %v537 = vpack.c.b16 %v446, %v445
    %v538 = vpack.c.b16 %v448, %v447
    %v539 = vpack.c.b16 %v450, %v449
    %v540 = vpack.c.b16 %v452, %v451
    %v541 = vpack.c.b16 %v454, %v453
    %v542 = vpack.c.b16 %v456, %v455
    %v543 = vpack.c.b16 %v458, %v457
    %v544 = vpack.c.b16 %v460, %v459
    %v545 = vpack.c.b16 %v462, %v461
    %v546 = vpack.c.b16 %v464, %v463
    %v547 = vpack.c.b16 %v466, %v465
    %v548 = vpack.c.b16 %v468, %v467
    %v549 = vpack.c.b16 %v470, %v469
    %v550 = vpack.c.b16 %v472, %v471
    %v551 = vpack.c.b16 %v474, %v473
    %v552 = vpack.c.b16 %v476, %v475
    %v553 = vpack.c.b16 %v478, %v477
    %v554 = vpack.c.b16 %v480, %v479
    %v555 = vpack.c.b16 %v482, %v481
    %v556 = vpack.c.b16 %v484, %v483
    %v557 = vpack.c.b16 %v486, %v485
    %v558 = vpack.c.b16 %v488, %v487
    %v559 = vpack.c.b16 %v490, %v489
    %v560 = vpack.c.b16 %v492, %v491
    %v561 = vpack.c.b16 %v494, %v493
    %v562 = vpack.c.b16 %v496, %v495
    %v563 = vpack.c.b16 %v498, %v497
    %v564 = vpack.c.b16 %v500, %v499
    %629 = vmatprep.subr.bf16.mxu0 0
    %630 = vmatpush1.bf16.msra.mxu0 %v508
    %631 = vmatprep.subr.bf16.mxu0 0
    %632 = vmatpush1.bf16.msra.mxu0 %v507
    %633 = vmatprep.subr.bf16.mxu0 0
    %634 = vmatpush1.bf16.msra.mxu0 %v506
    %635 = vmatprep.subr.bf16.mxu0 0
    %636 = vmatpush1.bf16.msra.mxu0 %v505
    %637 = vmatprep.subr.bf16.mxu0 0
    %638 = vmatpush1.bf16.msra.mxu0 %v504
    %639 = vmatprep.subr.bf16.mxu0 0
    %640 = vmatpush1.bf16.msra.mxu0 %v503
    %641 = vmatprep.subr.bf16.mxu0 0
    %642 = vmatpush1.bf16.msra.mxu0 %v502
    %643 = vmatprep.subr.bf16.mxu0 0
    %644 = vmatpush1.bf16.msra.mxu0 %v501
    %645 = vmatprep.subr.bf16.mxu0 0
    %646 = vmatpush2.bf16.msra.mxu0 %v516
    %647 = vmatprep.subr.bf16.mxu0 0
    %648 = vmatpush2.bf16.msra.mxu0 %v515
    %649 = vmatprep.subr.bf16.mxu0 0
    %650 = vmatpush2.bf16.msra.mxu0 %v514
    %651 = vmatprep.subr.bf16.mxu0 0
    %652 = vmatpush2.bf16.msra.mxu0 %v513
    %653 = vmatprep.subr.bf16.mxu0 0
    %654 = vmatpush2.bf16.msra.mxu0 %v512
    %655 = vmatprep.subr.bf16.mxu0 0
    %656 = vmatpush2.bf16.msra.mxu0 %v511
    %657 = vmatprep.subr.bf16.mxu0 0
    %658 = vmatpush2.bf16.msra.mxu0 %v510
    %659 = vmatprep.subr.bf16.mxu0 0
    %660 = vmatpush2.bf16.msra.mxu0 %v509
    %661 = vmatprep.mubr.bf16.mxu0 %v110
    %662 = vmatmul.mubr.bf16.gmra.mxu0 %v109
    %v663 = vpop.f32.mrf.mxu0
    %v664 = vadd.f32 0.0, %v663
    %v665 = vpop.f32.mrf.mxu0
    %v666 = vpop.f32.mrf.mxu0
    %v667 = vpop.f32.mrf.mxu0
    %668 = vdwg.mxu0
    %669 = vmatprep.subr.bf16.mxu0 0
    %670 = vmatpush1.bf16.msra.mxu0 %v524
    %671 = vmatprep.subr.bf16.mxu0 0
    %672 = vmatpush1.bf16.msra.mxu0 %v523
    %673 = vmatprep.subr.bf16.mxu0 0
    %674 = vmatpush1.bf16.msra.mxu0 %v522
    %675 = vmatprep.subr.bf16.mxu0 0
    %676 = vmatpush1.bf16.msra.mxu0 %v521
    %677 = vmatprep.subr.bf16.mxu0 0
    %678 = vmatpush1.bf16.msra.mxu0 %v520
    %679 = vmatprep.subr.bf16.mxu0 0
    %680 = vmatpush1.bf16.msra.mxu0 %v519
    %681 = vmatprep.subr.bf16.mxu0 0
    %682 = vmatpush1.bf16.msra.mxu0 %v518
    %683 = vmatprep.subr.bf16.mxu0 0
    %684 = vmatpush1.bf16.msra.mxu0 %v517
    %685 = vmatprep.subr.bf16.mxu0 0
    %686 = vmatpush2.bf16.msra.mxu0 %v532
    %687 = vmatprep.subr.bf16.mxu0 0
    %688 = vmatpush2.bf16.msra.mxu0 %v531
    %689 = vmatprep.subr.bf16.mxu0 0
    %690 = vmatpush2.bf16.msra.mxu0 %v530
    %691 = vmatprep.subr.bf16.mxu0 0
    %692 = vmatpush2.bf16.msra.mxu0 %v529
    %693 = vmatprep.subr.bf16.mxu0 0
    %694 = vmatpush2.bf16.msra.mxu0 %v528
    %695 = vmatprep.subr.bf16.mxu0 0
    %696 = vmatpush2.bf16.msra.mxu0 %v527
    %697 = vmatprep.subr.bf16.mxu0 0
    %698 = vmatpush2.bf16.msra.mxu0 %v526
    %699 = vmatprep.subr.bf16.mxu0 0
    %700 = vmatpush2.bf16.msra.mxu0 %v525
    %701 = vmatprep.mubr.bf16.mxu0 %v112
    %702 = vmatmul.mubr.bf16.gmra.mxu0 %v111
    %v703 = vpop.f32.mrf.mxu0
    %v704 = vadd.f32 %v664, %v703
    %v705 = vpop.f32.mrf.mxu0
    %v706 = vpop.f32.mrf.mxu0
    %v707 = vpop.f32.mrf.mxu0
    %708 = vdwg.mxu0
    %709 = vmatprep.subr.bf16.mxu0 0
    %710 = vmatpush1.bf16.msra.mxu0 %v540
    %711 = vmatprep.subr.bf16.mxu0 0
    %712 = vmatpush1.bf16.msra.mxu0 %v539
    %713 = vmatprep.subr.bf16.mxu0 0
    %714 = vmatpush1.bf16.msra.mxu0 %v538
    %715 = vmatprep.subr.bf16.mxu0 0
    %716 = vmatpush1.bf16.msra.mxu0 %v537
    %717 = vmatprep.subr.bf16.mxu0 0
    %718 = vmatpush1.bf16.msra.mxu0 %v536
    %719 = vmatprep.subr.bf16.mxu0 0
    %720 = vmatpush1.bf16.msra.mxu0 %v535
    %721 = vmatprep.subr.bf16.mxu0 0
    %722 = vmatpush1.bf16.msra.mxu0 %v534
    %723 = vmatprep.subr.bf16.mxu0 0
    %724 = vmatpush1.bf16.msra.mxu0 %v533
    %725 = vmatprep.subr.bf16.mxu0 0
    %726 = vmatpush2.bf16.msra.mxu0 %v548
    %727 = vmatprep.subr.bf16.mxu0 0
    %728 = vmatpush2.bf16.msra.mxu0 %v547
    %729 = vmatprep.subr.bf16.mxu0 0
    %730 = vmatpush2.bf16.msra.mxu0 %v546
    %731 = vmatprep.subr.bf16.mxu0 0
    %732 = vmatpush2.bf16.msra.mxu0 %v545
    %733 = vmatprep.subr.bf16.mxu0 0
    %734 = vmatpush2.bf16.msra.mxu0 %v544
    %735 = vmatprep.subr.bf16.mxu0 0
    %736 = vmatpush2.bf16.msra.mxu0 %v543
    %737 = vmatprep.subr.bf16.mxu0 0
    %738 = vmatpush2.bf16.msra.mxu0 %v542
    %739 = vmatprep.subr.bf16.mxu0 0
    %740 = vmatpush2.bf16.msra.mxu0 %v541
    %741 = vmatprep.mubr.bf16.mxu0 %v114
    %742 = vmatmul.mubr.bf16.gmra.mxu0 %v113
    %v743 = vpop.f32.mrf.mxu0
    %v744 = vadd.f32 %v704, %v743
    %v745 = vpop.f32.mrf.mxu0
    %v746 = vpop.f32.mrf.mxu0
    %v747 = vpop.f32.mrf.mxu0
    %748 = vdwg.mxu0
    %749 = vmatprep.subr.bf16.mxu0 0
    %750 = vmatpush1.bf16.msra.mxu0 %v556
    %751 = vmatprep.subr.bf16.mxu0 0
    %752 = vmatpush1.bf16.msra.mxu0 %v555
    %753 = vmatprep.subr.bf16.mxu0 0
    %754 = vmatpush1.bf16.msra.mxu0 %v554
    %755 = vmatprep.subr.bf16.mxu0 0
    %756 = vmatpush1.bf16.msra.mxu0 %v553
    %757 = vmatprep.subr.bf16.mxu0 0
    %758 = vmatpush1.bf16.msra.mxu0 %v552
    %759 = vmatprep.subr.bf16.mxu0 0
    %760 = vmatpush1.bf16.msra.mxu0 %v551
    %761 = vmatprep.subr.bf16.mxu0 0
    %762 = vmatpush1.bf16.msra.mxu0 %v550
    %763 = vmatprep.subr.bf16.mxu0 0
    %764 = vmatpush1.bf16.msra.mxu0 %v549
    %765 = vmatprep.subr.bf16.mxu0 0
    %766 = vmatpush2.bf16.msra.mxu0 %v564
    %767 = vmatprep.subr.bf16.mxu0 0
    %768 = vmatpush2.bf16.msra.mxu0 %v563
    %769 = vmatprep.subr.bf16.mxu0 0
    %770 = vmatpush2.bf16.msra.mxu0 %v562
    %771 = vmatprep.subr.bf16.mxu0 0
    %772 = vmatpush2.bf16.msra.mxu0 %v561
    %773 = vmatprep.subr.bf16.mxu0 0
    %774 = vmatpush2.bf16.msra.mxu0 %v560
    %775 = vmatprep.subr.bf16.mxu0 0
    %776 = vmatpush2.bf16.msra.mxu0 %v559
    %777 = vmatprep.subr.bf16.mxu0 0
    %778 = vmatpush2.bf16.msra.mxu0 %v558
    %779 = vmatprep.subr.bf16.mxu0 0
    %780 = vmatpush2.bf16.msra.mxu0 %v557
    %781 = vmatprep.mubr.bf16.mxu0 %v116
    %782 = vmatmul.mubr.bf16.gmra.mxu0 %v115
    %v783 = vpop.f32.mrf.mxu0
    %v784 = vadd.f32 %v744, %v783
    %v785 = vpop.f32.mrf.mxu0
    %v786 = vpop.f32.mrf.mxu0
    %v787 = vpop.f32.mrf.mxu0
    %788 = vdwg.mxu0
    %v789 = vadd.f32 %v62, %v784
    %790 = vst [vmem:[#allocation2] sm:$0x3] %v789
    // Predicated region
    $region42: #{_soft_rnn_gate_jit.1} parent=1 // pred_check
      %p791 = pneg %p50
    $region43: #{_soft_rnn_gate_jit.1} parent=1 // pred_check_branch
      %793 = sbr.rel (%p791) target = $region45
    $region44: #{_soft_rnn_gate_jit.1} parent=1 // pred_region
      %v794 = vld [vmem:[%s2] sm:$0x3]
      %v795 = vld [vmem:[%s3] sm:$0x3]
      %v796 = vld [vmem:[#allocation2] sm:$0x3]
      %v797 = vpack.c.bf16 %v794, %v794
      %v798 = vld [vmem:[%s4] sm:$0xf]
      %v799 = vld [vmem:[%s4 + $0x4] sm:$0xf]
      %v800 = vld [vmem:[%s4 + $0x8] sm:$0xf]
      %v801 = vld [vmem:[%s4 + $0xc] sm:$0xf]
      %v806 = vunpack.c.l.b16 %v798
      %v807 = vunpack.c.l.b16 %v799
      %v808 = vunpack.c.l.b16 %v800
      %v809 = vunpack.c.l.b16 %v801
      %v810 = vpack.c.b16 %v807, %v806
      %v811 = vpack.c.b16 %v809, %v808
      %vm814 = vcmask 261120
      %v816 = vsel %vm814, %v797, 0
      %818 = vmatprep.subr.bf16.mxu0 0
      %819 = vmatpush1.bf16.msra.mxu0 0
      %820 = vmatprep.subr.bf16.mxu0 0
      %821 = vmatpush1.bf16.msra.mxu0 0
      %822 = vmatprep.subr.bf16.mxu0 0
      %823 = vmatpush1.bf16.msra.mxu0 0
      %824 = vmatprep.subr.bf16.mxu0 0
      %825 = vmatpush1.bf16.msra.mxu0 0
      %826 = vmatprep.subr.bf16.mxu0 0
      %827 = vmatpush1.bf16.msra.mxu0 0
      %828 = vmatprep.subr.bf16.mxu0 0
      %829 = vmatpush1.bf16.msra.mxu0 0
      %830 = vmatprep.subr.bf16.mxu0 0
      %831 = vmatpush1.bf16.msra.mxu0 %v811
      %832 = vmatprep.subr.bf16.mxu0 0
      %833 = vmatpush1.bf16.msra.mxu0 %v810
      %834 = vmatprep.subr.bf16.mxu0 0
      %835 = vmatpush2.bf16.msra.mxu0 0
      %836 = vmatprep.subr.bf16.mxu0 0
      %837 = vmatpush2.bf16.msra.mxu0 0
      %838 = vmatprep.subr.bf16.mxu0 0
      %839 = vmatpush2.bf16.msra.mxu0 0
      %840 = vmatprep.subr.bf16.mxu0 0
      %841 = vmatpush2.bf16.msra.mxu0 0
      %842 = vmatprep.subr.bf16.mxu0 0
      %843 = vmatpush2.bf16.msra.mxu0 0
      %844 = vmatprep.subr.bf16.mxu0 0
      %845 = vmatpush2.bf16.msra.mxu0 0
      %846 = vmatprep.subr.bf16.mxu0 0
      %847 = vmatpush2.bf16.msra.mxu0 0
      %848 = vmatprep.subr.bf16.mxu0 0
      %849 = vmatpush2.bf16.msra.mxu0 0
      %850 = vmatprep.mubr.bf16.mxu0 0
      %851 = vmatmul.mubr.bf16.gmra.mxu0 %v816
      %v852 = vpop.f32.mrf.mxu0
      %v853 = vadd.f32 0.0, %v852
      %v854 = vpop.f32.mrf.mxu0
      %v855 = vpop.f32.mrf.mxu0
      %v856 = vpop.f32.mrf.mxu0
      %857 = vdwg.mxu0
      %v858 = vadd.f32 %v796, %v853
      %v859 = vlaneseq
      %v860 = vand.u32 %v859, 127
      %vm861 = vcmp.ge.s32.totalorder %v860, 64
      %vm862 = vcmp.lt.s32.totalorder %v860, 96
      %vm863 = vmand %vm861, %vm862
      %v864 = vmul.f32 %v858, 2.0
      %v865 = vsel %vm863, %v864, %v858
      %v866 = vxor.u32 %v865, 2147483648
      %v867 = vmul.f32 %v866, 1.442695
      %v868 = vpow.pop %v867
      %v869 = vadd.f32 %v868, 1.0
      %v870 = vrcp.pop %v869
      %v871 = vmul.f32 1.0, %v870
      %v872 = vmul.f32 %v871, 2.0
      %v873 = vsub.f32 %v872, 1.0
      %v874 = vsel %vm863, %v873, %v871
      %876 = vrot.lane.b32.xlu0 %v795, 32
      %v877 = vpop.permute.xlu0 %876
      %v879 = vmul.f32 %v874, %v877
      %881 = vrot.lane.b32.xlu0 %v874, 64
      %v882 = vpop.permute.xlu0 %881
      %v884 = vmul.f32 %v874, %v882
      %886 = vrot.lane.b32.xlu0 %v884, 32
      %v887 = vpop.permute.xlu0 %886
      %v889 = vadd.f32 %v879, %v887
      %v890 = vtanh.pop %v889
      %892 = vrot.lane.b32.xlu0 %v890, 64
      %v893 = vpop.permute.xlu0 %892
      %v895 = vmul.f32 %v874, %v893
      %v896 = vld [vmem:[%s6] sm:$0x1]
      %v898 = vlaneseq
      %v899 = vshrl.u32 %v898, 7
      %v900 = vsub.s32 0, %v899
      %v901 = vrot.slane %v896, %v900
      %902 = vrot.lane.b32.xlu0 %v901, 96
      %v903 = vpop.permute.xlu0 %902
      %v905 = vmul.f32 %v895, %v903
      %907 = vrot.lane.b32.xlu0 %v905, 32
      %v908 = vpop.permute.xlu0 %907
      %vm910 = vcmask 254976
      %v911 = vsel %vm910, %v908, 0.0
      %912 = vadd.xlane.f32.xlu0 %v911
      %v913 = vpop.xlane.xlu0 %912
      %s914 = sld [smem:[#allocation3]]
      %v915 = vstv %s914
      %v916 = vadd.f32 %v913, %v915
      %v917 = vxor.u32 %v916, 2147483648
      %v918 = vmul.f32 %v917, 1.442695
      %v919 = vpow.pop %v918
      %v920 = vadd.f32 %v919, 1.0
      %v921 = vrcp.pop %v920
      %v922 = vmul.f32 1.0, %v921
      %vm923 = vcmask 1024
      %924 = vst.msk [vmem:[%s8] sm:$0x3] %vm923, %v922
      %926 = vrot.lane.b32.xlu0 %v895, 32
      %v927 = vpop.permute.xlu0 %926
      %929 = vst.msk [vmem:[#allocation7] sm:$0x3] %vm910, %v927
      %931 = vrot.lane.b32.xlu0 %v889, 96
      %v932 = vpop.permute.xlu0 %931
      %934 = vst.msk [vmem:[#allocation8] sm:$0x3] %vm910, %v932
    $region45: #{_soft_rnn_gate_jit.1} parent=1 // pred_fallthru
      _
    // Predicated region
    $region46: #{_soft_rnn_gate_jit.1} parent=1 // pred_check
      _
    $region47: #{_soft_rnn_gate_jit.1} parent=1 // pred_check_branch
      %936 = sbr.rel (0) target = $region49
    $region48: #{_soft_rnn_gate_jit.1} parent=1 // pred_region
      _
    $region49: #{_soft_rnn_gate_jit.1} parent=1 // pred_fallthru
      _
    // Predicated region
    $region50: #{_soft_rnn_gate_jit.1} parent=1 // pred_check
      _
    $region51: #{_soft_rnn_gate_jit.1} parent=1 // pred_check_branch
      %938 = sbr.rel (0) target = $region53
    $region52: #{_soft_rnn_gate_jit.1} parent=1 // pred_region
      %s940 = ssub.s32 32, 32
      %941 = vsyncadd [#allocation6], %s940
      %s943 = sshll.u32 [#allocation7], 4
      %s944 = int_to_ptr.vmem [resolvable:$true] %s943
      %946 = dma.vmem_to_hbm [thread:$0]  %s944, 32, %s9, [#allocation6]
    $region53: #{_soft_rnn_gate_jit.1} parent=1 // pred_fallthru
      _
    // Predicated region
    $region54: #{_soft_rnn_gate_jit.1} parent=1 // pred_check
      _
    $region55: #{_soft_rnn_gate_jit.1} parent=1 // pred_check_branch
      %948 = sbr.rel (0) target = $region57
    $region56: #{_soft_rnn_gate_jit.1} parent=1 // pred_region
      %s950 = ssub.s32 32, 32
      %951 = vsyncadd [#allocation9], %s950
      %s953 = sshll.u32 [#allocation8], 4
      %s954 = int_to_ptr.vmem [resolvable:$true] %s953
      %956 = dma.vmem_to_hbm [thread:$0]  %s954, 32, %s10, [#allocation9]
    $region57: #{_soft_rnn_gate_jit.1} parent=1 // pred_fallthru
      _
    // Predicated region
    $region58: #{_soft_rnn_gate_jit.1} parent=1 // pred_check
      _
    $region59: #{_soft_rnn_gate_jit.1} parent=1 // pred_check_branch
      %958 = sbr.rel (0) target = $region61
    $region60: #{_soft_rnn_gate_jit.1} parent=1 // pred_region
      _
    $region61: #{_soft_rnn_gate_jit.1} parent=1 // pred_fallthru
      _
    // Predicated region
    $region62: #{_soft_rnn_gate_jit.1} parent=1 // pred_check
      _
    $region63: #{_soft_rnn_gate_jit.1} parent=1 // pred_check_branch
      %960 = sbr.rel (0) target = $region65
    $region64: #{_soft_rnn_gate_jit.1} parent=1 // pred_region
      %961 = dma.done [#allocation6], 32
    $region65: #{_soft_rnn_gate_jit.1} parent=1 // pred_fallthru
      _
    // Predicated region
    $region66: #{_soft_rnn_gate_jit.1} parent=1 // pred_check
      _
    $region67: #{_soft_rnn_gate_jit.1} parent=1 // pred_check_branch
      %963 = sbr.rel (0) target = $region69
    $region68: #{_soft_rnn_gate_jit.1} parent=1 // pred_region
      %964 = dma.done [#allocation9], 32
    $region69: #{_soft_rnn_gate_jit.1} parent=1 // pred_fallthru
      _
    %965 = vsyncpa [#allocation5], 1
    %966 = vsyncpa [#allocation6], 1
    %967 = vsyncpa [#allocation9], 1

// kernel: _soft_rnn_gate_jit.1
$region0: #{_soft_rnn_gate_jit.1}
  #allocation0 [shape = 'u32[]', space=smem, size = 0x4, offset = 0x4, fixed_abs, tag = 'smem constant byte address 0x4 - core index']
  #allocation1 [shape = 'u32[144,128]{1,0:T(1,128)}', space=vmem, size = 0x12000, scoped, tag = 'internal scratch']
  #allocation2 [shape = 'f32[2,128]{1,0:T(2,128)}', space=vmem, size = 0x400, scoped, tag = 'scratch operand']
  #allocation3 [shape = 'f32[1,1]{1,0:T(1,128)S(6)}', space=smem, size = 0x200, scoped, tag = 'scoped memory for _soft_rnn_gate_jit.1']
  %s0 = inlined_call_operand.vmem [shape: f32[2,1024], index: 0, kind: input, shape index: {}]
  %s1 = inlined_call_operand.hbm [shape: bf16[1024,128], index: 1, kind: input, shape index: {}]
  %s2 = inlined_call_operand.vmem [shape: f32[2,32], index: 2, kind: input, shape index: {}]
  %s3 = inlined_call_operand.vmem [shape: f32[2,32], index: 3, kind: input, shape index: {}]
  %s4 = inlined_call_operand.vmem [shape: bf16[32,128], index: 4, kind: input, shape index: {}]
  %s5 = inlined_call_operand.vmem [shape: f32[1,128], index: 5, kind: input, shape index: {}]
  %s6 = inlined_call_operand.vmem [shape: f32[1,32], index: 6, kind: input, shape index: {}]
  %s7 = inlined_call_operand.<no memory space> [shape: f32[1,1], index: 7, kind: input, shape index: {}]
  %s8 = inlined_call_operand.vmem [shape: f32[2,1], index: 8, kind: output, shape index: {0}]
  %s9 = inlined_call_operand.hbm [shape: f32[2,32], index: 9, kind: output, shape index: {1}]
  %s10 = inlined_call_operand.hbm [shape: f32[2,32], index: 10, kind: output, shape index: {2}]
  %11 = xla_tuple %s8, %s9, %s10
  %s12 = sld [smem:[#allocation0]]
  $region70: #{_soft_rnn_gate_jit.1} parent=0
    _
  %s14 = ssub.s32 1, %s12
  %s15 = scalar_select 0, %s14, %s12
  %16 = sst [smem:[#allocation3]] %s7
  $region1: #{_soft_rnn_gate_jit.1} parent=0
    #allocation4 [shape = 'u8[262144]{0}', space=vmem, size = 0x40000, scoped, tag = 'input window, operand 1, single buffered']
    #allocation5 [shape = 's32[1]{0}', space=sflag, size = 0x4, scoped, tag = 'scoped memory for _soft_rnn_gate_jit.1']
    #allocation6 [shape = 's32[1]{0}', space=sflag, size = 0x4, scoped, tag = 'scoped memory for _soft_rnn_gate_jit.1']
    #allocation7 [shape = 'u8[1024]{0}', space=vmem, size = 0x400, scoped, tag = 'output window, operand 1, single buffered']
    #allocation8 [shape = 'u8[1024]{0}', space=vmem, size = 0x400, scoped, tag = 'output window, operand 2, single buffered']
    #allocation9 [shape = 's32[1]{0}', space=sflag, size = 0x4, scoped, tag = 'scoped memory for _soft_rnn_gate_jit.1']
    %17 = vsyncpa [#allocation5], 0
    %18 = vsyncpa [#allocation6], 0
    %19 = vsyncpa [#allocation9], 0
    // Predicated region
    $region2: #{_soft_rnn_gate_jit.1} parent=1 // pred_check
      _
    $region3: #{_soft_rnn_gate_jit.1} parent=1 // pred_check_branch
      %21 = sbr.rel (0) target = $region5
    $region4: #{_soft_rnn_gate_jit.1} parent=1 // pred_region
      _
    $region5: #{_soft_rnn_gate_jit.1} parent=1 // pred_fallthru
      _
    // Predicated region
    $region6: #{_soft_rnn_gate_jit.1} parent=1 // pred_check
      _
    $region7: #{_soft_rnn_gate_jit.1} parent=1 // pred_check_branch
      %23 = sbr.rel (0) target = $region9
    $region8: #{_soft_rnn_gate_jit.1} parent=1 // pred_region
      %s25 = ssub.s32 8192, 8192
      %26 = vsyncadd [#allocation5], %s25
      %s27 = sshll.u32 [#allocation4], 4
      %s28 = int_to_ptr.vmem [resolvable:$true] %s27
      %33 = dma.hbm_to_vmem [thread:$0]  %s1, 8192, %s28, [#allocation5], 64, 64, 4
    $region9: #{_soft_rnn_gate_jit.1} parent=1 // pred_fallthru
      _
    // Predicated region
    $region10: #{_soft_rnn_gate_jit.1} parent=1 // pred_check
      _
    $region11: #{_soft_rnn_gate_jit.1} parent=1 // pred_check_branch
      %35 = sbr.rel (0) target = $region13
    $region12: #{_soft_rnn_gate_jit.1} parent=1 // pred_region
      _
    $region13: #{_soft_rnn_gate_jit.1} parent=1 // pred_fallthru
      _
    // Predicated region
    $region14: #{_soft_rnn_gate_jit.1} parent=1 // pred_check
      _
    $region15: #{_soft_rnn_gate_jit.1} parent=1 // pred_check_branch
      %37 = sbr.rel (0) target = $region17
    $region16: #{_soft_rnn_gate_jit.1} parent=1 // pred_region
      _
    $region17: #{_soft_rnn_gate_jit.1} parent=1 // pred_fallthru
      _
    // Predicated region
    $region18: #{_soft_rnn_gate_jit.1} parent=1 // pred_check
      _
    $region19: #{_soft_rnn_gate_jit.1} parent=1 // pred_check_branch
      %39 = sbr.rel (0) target = $region21
    $region20: #{_soft_rnn_gate_jit.1} parent=1 // pred_region
      _
    $region21: #{_soft_rnn_gate_jit.1} parent=1 // pred_fallthru
      _
    // Predicated region
    $region22: #{_soft_rnn_gate_jit.1} parent=1 // pred_check
      _
    $region23: #{_soft_rnn_gate_jit.1} parent=1 // pred_check_branch
      %41 = sbr.rel (0) target = $region25
    $region24: #{_soft_rnn_gate_jit.1} parent=1 // pred_region
      _
    $region25: #{_soft_rnn_gate_jit.1} parent=1 // pred_fallthru
      _
    // Predicated region
    $region26: #{_soft_rnn_gate_jit.1} parent=1 // pred_check
      _
    $region27: #{_soft_rnn_gate_jit.1} parent=1 // pred_check_branch
      %43 = sbr.rel (0) target = $region29
    $region28: #{_soft_rnn_gate_jit.1} parent=1 // pred_region
      _
    $region29: #{_soft_rnn_gate_jit.1} parent=1 // pred_fallthru
      _
    // Predicated region
    $region30: #{_soft_rnn_gate_jit.1} parent=1 // pred_check
      _
    $region31: #{_soft_rnn_gate_jit.1} parent=1 // pred_check_branch
      %45 = sbr.rel (0) target = $region33
    $region32: #{_soft_rnn_gate_jit.1} parent=1 // pred_region
      _
    $region33: #{_soft_rnn_gate_jit.1} parent=1 // pred_fallthru
      _
    // Predicated region
    $region34: #{_soft_rnn_gate_jit.1} parent=1 // pred_check
      _
    $region35: #{_soft_rnn_gate_jit.1} parent=1 // pred_check_branch
      %47 = sbr.rel (0) target = $region37
    $region36: #{_soft_rnn_gate_jit.1} parent=1 // pred_region
      %48 = dma.done [#allocation5], 8192
    $region37: #{_soft_rnn_gate_jit.1} parent=1 // pred_fallthru
      _
    %p50 = scmp.eq.s32.totalorder 0, 0
    // Predicated region
    $region38: #{_soft_rnn_gate_jit.1} parent=1 // pred_check
      %p51 = pneg %p50
    $region39: #{_soft_rnn_gate_jit.1} parent=1 // pred_check_branch
      %53 = sbr.rel (%p51) target = $region41
    $region40: #{_soft_rnn_gate_jit.1} parent=1 // pred_region
      %v54 = vld [vmem:[%s5] sm:$0x1]
      %v56 = vlaneseq
      %v57 = vshrl.u32 %v56, 7
      %v58 = vsub.s32 0, %v57
      %v59 = vrot.slane %v54, %v58
      %61 = vst [vmem:[#allocation2] sm:$0x3] %v59
    $region41: #{_soft_rnn_gate_jit.1} parent=1 // pred_fallthru
      _
    %v62 = vld [vmem:[#allocation2] sm:$0x3]
    %v63 = vld [vmem:[%s0] sm:$0xff]
    %v64 = vld [vmem:[%s0 + $0x8] sm:$0xff]
    %v67 = vcombine.high %v63, %v63
    %v69 = vunpack.c.l.s4 1983009808
    %v70 = vunpack.c.0.s8 %v69
    %v71 = vlaneseq
    %v72 = vshrl.u32 %v71, 7
    %v73 = vsub.s32 %v70, %v72
    %v74 = vrot.slane %v63, %v73
    %v76 = vunpack.c.l.s4 1983009808
    %v77 = vunpack.c.0.s8 %v76
    %v78 = vlaneseq
    %v79 = vshrl.u32 %v78, 7
    %v80 = vsub.s32 %v77, %v79
    %v81 = vrot.slane %v67, %v80
    %v82 = vcombine.high %v74, %v74
    %v83 = vcombine.high %v81, %v81
    %v84 = vcombine.high %v64, %v64
    %v86 = vunpack.c.l.s4 1983009808
    %v87 = vunpack.c.0.s8 %v86
    %v88 = vlaneseq
    %v89 = vshrl.u32 %v88, 7
    %v90 = vsub.s32 %v87, %v89
    %v91 = vrot.slane %v64, %v90
    %v93 = vunpack.c.l.s4 1983009808
    %v94 = vunpack.c.0.s8 %v93
    %v95 = vlaneseq
    %v96 = vshrl.u32 %v95, 7
    %v97 = vsub.s32 %v94, %v96
    %v98 = vrot.slane %v84, %v97
    %v99 = vcombine.high %v91, %v91
    %v100 = vcombine.high %v98, %v98
    %v109 = vpack.c.bf16 %v74, %v74
    %v110 = vpack.c.bf16 %v82, %v82
    %v111 = vpack.c.bf16 %v81, %v81
    %v112 = vpack.c.bf16 %v83, %v83
    %v113 = vpack.c.bf16 %v91, %v91
    %v114 = vpack.c.bf16 %v99, %v99
    %v115 = vpack.c.bf16 %v98, %v98
    %v116 = vpack.c.bf16 %v100, %v100
    %v117 = vld [vmem:[#allocation4] sm:$0xf]
    %v118 = vld [vmem:[#allocation4 + $0x4] sm:$0xf]
    %v119 = vld [vmem:[#allocation4 + $0x8] sm:$0xf]
    %v120 = vld [vmem:[#allocation4 + $0xc] sm:$0xf]
    %v121 = vld [vmem:[#allocation4 + $0x10] sm:$0xf]
    %v122 = vld [vmem:[#allocation4 + $0x14] sm:$0xf]
    %v123 = vld [vmem:[#allocation4 + $0x18] sm:$0xf]
    %v124 = vld [vmem:[#allocation4 + $0x1c] sm:$0xf]
    %v125 = vld [vmem:[#allocation4 + $0x20] sm:$0xf]
    %v126 = vld [vmem:[#allocation4 + $0x24] sm:$0xf]
    %v127 = vld [vmem:[#allocation4 + $0x28] sm:$0xf]
    %v128 = vld [vmem:[#allocation4 + $0x2c] sm:$0xf]
    %v129 = vld [vmem:[#allocation4 + $0x30] sm:$0xf]
    %v130 = vld [vmem:[#allocation4 + $0x34] sm:$0xf]
    %v131 = vld [vmem:[#allocation4 + $0x38] sm:$0xf]
    %v132 = vld [vmem:[#allocation4 + $0x3c] sm:$0xf]
    %v133 = vld [vmem:[#allocation4 + $0x40] sm:$0xf]
    %v134 = vld [vmem:[#allocation4 + $0x44] sm:$0xf]
    %v135 = vld [vmem:[#allocation4 + $0x48] sm:$0xf]
    %v136 = vld [vmem:[#allocation4 + $0x4c] sm:$0xf]
    %v137 = vld [vmem:[#allocation4 + $0x50] sm:$0xf]
    %v138 = vld [vmem:[#allocation4 + $0x54] sm:$0xf]
    %v139 = vld [vmem:[#allocation4 + $0x58] sm:$0xf]
    %v140 = vld [vmem:[#allocation4 + $0x5c] sm:$0xf]
    %v141 = vld [vmem:[#allocation4 + $0x60] sm:$0xf]
    %v142 = vld [vmem:[#allocation4 + $0x64] sm:$0xf]
    %v143 = vld [vmem:[#allocation4 + $0x68] sm:$0xf]
    %v144 = vld [vmem:[#allocation4 + $0x6c] sm:$0xf]
    %v145 = vld [vmem:[#allocation4 + $0x70] sm:$0xf]
    %v146 = vld [vmem:[#allocation4 + $0x74] sm:$0xf]
    %v147 = vld [vmem:[#allocation4 + $0x78] sm:$0xf]
    %v148 = vld [vmem:[#allocation4 + $0x7c] sm:$0xf]
    %v149 = vld [vmem:[#allocation4 + $0x80] sm:$0xf]
    %v150 = vld [vmem:[#allocation4 + $0x84] sm:$0xf]
    %v151 = vld [vmem:[#allocation4 + $0x88] sm:$0xf]
    %v152 = vld [vmem:[#allocation4 + $0x8c] sm:$0xf]
    %v153 = vld [vmem:[#allocation4 + $0x90] sm:$0xf]
    %v154 = vld [vmem:[#allocation4 + $0x94] sm:$0xf]
    %v155 = vld [vmem:[#allocation4 + $0x98] sm:$0xf]
    %v156 = vld [vmem:[#allocation4 + $0x9c] sm:$0xf]
    %v157 = vld [vmem:[#allocation4 + $0xa0] sm:$0xf]
    %v158 = vld [vmem:[#allocation4 + $0xa4] sm:$0xf]
    %v159 = vld [vmem:[#allocation4 + $0xa8] sm:$0xf]
    %v160 = vld [vmem:[#allocation4 + $0xac] sm:$0xf]
    %v161 = vld [vmem:[#allocation4 + $0xb0] sm:$0xf]
    %v162 = vld [vmem:[#allocation4 + $0xb4] sm:$0xf]
    %v163 = vld [vmem:[#allocation4 + $0xb8] sm:$0xf]
    %v164 = vld [vmem:[#allocation4 + $0xbc] sm:$0xf]
    %v165 = vld [vmem:[#allocation4 + $0xc0] sm:$0xf]
    %v166 = vld [vmem:[#allocation4 + $0xc4] sm:$0xf]
    %v167 = vld [vmem:[#allocation4 + $0xc8] sm:$0xf]
    %v168 = vld [vmem:[#allocation4 + $0xcc] sm:$0xf]
    %v169 = vld [vmem:[#allocation4 + $0xd0] sm:$0xf]
    %v170 = vld [vmem:[#allocation4 + $0xd4] sm:$0xf]
    %v171 = vld [vmem:[#allocation4 + $0xd8] sm:$0xf]
    %v172 = vld [vmem:[#allocation4 + $0xdc] sm:$0xf]
    %v173 = vld [vmem:[#allocation4 + $0xe0] sm:$0xf]
    %v174 = vld [vmem:[#allocation4 + $0xe4] sm:$0xf]
    %v175 = vld [vmem:[#allocation4 + $0xe8] sm:$0xf]
    %v176 = vld [vmem:[#allocation4 + $0xec] sm:$0xf]
    %v177 = vld [vmem:[#allocation4 + $0xf0] sm:$0xf]
    %v178 = vld [vmem:[#allocation4 + $0xf4] sm:$0xf]
    %v179 = vld [vmem:[#allocation4 + $0xf8] sm:$0xf]
    %v180 = vld [vmem:[#allocation4 + $0xfc] sm:$0xf]
    %v181 = vld [vmem:[#allocation4 + $0x100] sm:$0xf]
    %v182 = vld [vmem:[#allocation4 + $0x104] sm:$0xf]
    %v183 = vld [vmem:[#allocation4 + $0x108] sm:$0xf]
    %v184 = vld [vmem:[#allocation4 + $0x10c] sm:$0xf]
    %v185 = vld [vmem:[#allocation4 + $0x110] sm:$0xf]
    %v186 = vld [vmem:[#allocation4 + $0x114] sm:$0xf]
    %v187 = vld [vmem:[#allocation4 + $0x118] sm:$0xf]
    %v188 = vld [vmem:[#allocation4 + $0x11c] sm:$0xf]
    %v189 = vld [vmem:[#allocation4 + $0x120] sm:$0xf]
    %v190 = vld [vmem:[#allocation4 + $0x124] sm:$0xf]
    %v191 = vld [vmem:[#allocation4 + $0x128] sm:$0xf]
    %v192 = vld [vmem:[#allocation4 + $0x12c] sm:$0xf]
    %v193 = vld [vmem:[#allocation4 + $0x130] sm:$0xf]
    %v194 = vld [vmem:[#allocation4 + $0x134] sm:$0xf]
    %v195 = vld [vmem:[#allocation4 + $0x138] sm:$0xf]
    %v196 = vld [vmem:[#allocation4 + $0x13c] sm:$0xf]
    %v197 = vld [vmem:[#allocation4 + $0x140] sm:$0xf]
    %v198 = vld [vmem:[#allocation4 + $0x144] sm:$0xf]
    %v199 = vld [vmem:[#allocation4 + $0x148] sm:$0xf]
    %v200 = vld [vmem:[#allocation4 + $0x14c] sm:$0xf]
    %v201 = vld [vmem:[#allocation4 + $0x150] sm:$0xf]
    %v202 = vld [vmem:[#allocation4 + $0x154] sm:$0xf]
    %v203 = vld [vmem:[#allocation4 + $0x158] sm:$0xf]
    %v204 = vld [vmem:[#allocation4 + $0x15c] sm:$0xf]
    %v205 = vld [vmem:[#allocation4 + $0x160] sm:$0xf]
    %v206 = vld [vmem:[#allocation4 + $0x164] sm:$0xf]
    %v207 = vld [vmem:[#allocation4 + $0x168] sm:$0xf]
    %v208 = vld [vmem:[#allocation4 + $0x16c] sm:$0xf]
    %v209 = vld [vmem:[#allocation4 + $0x170] sm:$0xf]
    %v210 = vld [vmem:[#allocation4 + $0x174] sm:$0xf]
    %v211 = vld [vmem:[#allocation4 + $0x178] sm:$0xf]
    %v212 = vld [vmem:[#allocation4 + $0x17c] sm:$0xf]
    %v213 = vld [vmem:[#allocation4 + $0x180] sm:$0xf]
    %v214 = vld [vmem:[#allocation4 + $0x184] sm:$0xf]
    %v215 = vld [vmem:[#allocation4 + $0x188] sm:$0xf]
    %v216 = vld [vmem:[#allocation4 + $0x18c] sm:$0xf]
    %v217 = vld [vmem:[#allocation4 + $0x190] sm:$0xf]
    %v218 = vld [vmem:[#allocation4 + $0x194] sm:$0xf]
    %v219 = vld [vmem:[#allocation4 + $0x198] sm:$0xf]
    %v220 = vld [vmem:[#allocation4 + $0x19c] sm:$0xf]
    %v221 = vld [vmem:[#allocation4 + $0x1a0] sm:$0xf]
    %v222 = vld [vmem:[#allocation4 + $0x1a4] sm:$0xf]
    %v223 = vld [vmem:[#allocation4 + $0x1a8] sm:$0xf]
    %v224 = vld [vmem:[#allocation4 + $0x1ac] sm:$0xf]
    %v225 = vld [vmem:[#allocation4 + $0x1b0] sm:$0xf]
    %v226 = vld [vmem:[#allocation4 + $0x1b4] sm:$0xf]
    %v227 = vld [vmem:[#allocation4 + $0x1b8] sm:$0xf]
    %v228 = vld [vmem:[#allocation4 + $0x1bc] sm:$0xf]
    %v229 = vld [vmem:[#allocation4 + $0x1c0] sm:$0xf]
    %v230 = vld [vmem:[#allocation4 + $0x1c4] sm:$0xf]
    %v231 = vld [vmem:[#allocation4 + $0x1c8] sm:$0xf]
    %v232 = vld [vmem:[#allocation4 + $0x1cc] sm:$0xf]
    %v233 = vld [vmem:[#allocation4 + $0x1d0] sm:$0xf]
    %v234 = vld [vmem:[#allocation4 + $0x1d4] sm:$0xf]
    %v235 = vld [vmem:[#allocation4 + $0x1d8] sm:$0xf]
    %v236 = vld [vmem:[#allocation4 + $0x1dc] sm:$0xf]
    %v237 = vld [vmem:[#allocation4 + $0x1e0] sm:$0xf]
    %v238 = vld [vmem:[#allocation4 + $0x1e4] sm:$0xf]
    %v239 = vld [vmem:[#allocation4 + $0x1e8] sm:$0xf]
    %v240 = vld [vmem:[#allocation4 + $0x1ec] sm:$0xf]
    %v241 = vld [vmem:[#allocation4 + $0x1f0] sm:$0xf]
    %v242 = vld [vmem:[#allocation4 + $0x1f4] sm:$0xf]
    %v243 = vld [vmem:[#allocation4 + $0x1f8] sm:$0xf]
    %v244 = vld [vmem:[#allocation4 + $0x1fc] sm:$0xf]
    %v373 = vunpack.c.l.b16 %v117
    %v374 = vunpack.c.l.b16 %v118
    %v375 = vunpack.c.l.b16 %v119
    %v376 = vunpack.c.l.b16 %v120
    %v377 = vunpack.c.l.b16 %v121
    %v378 = vunpack.c.l.b16 %v122
    %v379 = vunpack.c.l.b16 %v123
    %v380 = vunpack.c.l.b16 %v124
    %v381 = vunpack.c.l.b16 %v125
    %v382 = vunpack.c.l.b16 %v126
    %v383 = vunpack.c.l.b16 %v127
    %v384 = vunpack.c.l.b16 %v128
    %v385 = vunpack.c.l.b16 %v129
    %v386 = vunpack.c.l.b16 %v130
    %v387 = vunpack.c.l.b16 %v131
    %v388 = vunpack.c.l.b16 %v132
    %v389 = vunpack.c.l.b16 %v133
    %v390 = vunpack.c.l.b16 %v134
    %v391 = vunpack.c.l.b16 %v135
    %v392 = vunpack.c.l.b16 %v136
    %v393 = vunpack.c.l.b16 %v137
    %v394 = vunpack.c.l.b16 %v138
    %v395 = vunpack.c.l.b16 %v139
    %v396 = vunpack.c.l.b16 %v140
    %v397 = vunpack.c.l.b16 %v141
    %v398 = vunpack.c.l.b16 %v142
    %v399 = vunpack.c.l.b16 %v143
    %v400 = vunpack.c.l.b16 %v144
    %v401 = vunpack.c.l.b16 %v145
    %v402 = vunpack.c.l.b16 %v146
    %v403 = vunpack.c.l.b16 %v147
    %v404 = vunpack.c.l.b16 %v148
    %v405 = vunpack.c.l.b16 %v149
    %v406 = vunpack.c.l.b16 %v150
    %v407 = vunpack.c.l.b16 %v151
    %v408 = vunpack.c.l.b16 %v152
    %v409 = vunpack.c.l.b16 %v153
    %v410 = vunpack.c.l.b16 %v154
    %v411 = vunpack.c.l.b16 %v155
    %v412 = vunpack.c.l.b16 %v156
    %v413 = vunpack.c.l.b16 %v157
    %v414 = vunpack.c.l.b16 %v158
    %v415 = vunpack.c.l.b16 %v159
    %v416 = vunpack.c.l.b16 %v160
    %v417 = vunpack.c.l.b16 %v161
    %v418 = vunpack.c.l.b16 %v162
    %v419 = vunpack.c.l.b16 %v163
    %v420 = vunpack.c.l.b16 %v164
    %v421 = vunpack.c.l.b16 %v165
    %v422 = vunpack.c.l.b16 %v166
    %v423 = vunpack.c.l.b16 %v167
    %v424 = vunpack.c.l.b16 %v168
    %v425 = vunpack.c.l.b16 %v169
    %v426 = vunpack.c.l.b16 %v170
    %v427 = vunpack.c.l.b16 %v171
    %v428 = vunpack.c.l.b16 %v172
    %v429 = vunpack.c.l.b16 %v173
    %v430 = vunpack.c.l.b16 %v174
    %v431 = vunpack.c.l.b16 %v175
    %v432 = vunpack.c.l.b16 %v176
    %v433 = vunpack.c.l.b16 %v177
    %v434 = vunpack.c.l.b16 %v178
    %v435 = vunpack.c.l.b16 %v179
    %v436 = vunpack.c.l.b16 %v180
    %v437 = vunpack.c.l.b16 %v181
    %v438 = vunpack.c.l.b16 %v182
    %v439 = vunpack.c.l.b16 %v183
    %v440 = vunpack.c.l.b16 %v184
    %v441 = vunpack.c.l.b16 %v185
    %v442 = vunpack.c.l.b16 %v186
    %v443 = vunpack.c.l.b16 %v187
    %v444 = vunpack.c.l.b16 %v188
    %v445 = vunpack.c.l.b16 %v189
    %v446 = vunpack.c.l.b16 %v190
    %v447 = vunpack.c.l.b16 %v191
    %v448 = vunpack.c.l.b16 %v192
    %v449 = vunpack.c.l.b16 %v193
    %v450 = vunpack.c.l.b16 %v194
    %v451 = vunpack.c.l.b16 %v195
    %v452 = vunpack.c.l.b16 %v196
    %v453 = vunpack.c.l.b16 %v197
    %v454 = vunpack.c.l.b16 %v198
    %v455 = vunpack.c.l.b16 %v199
    %v456 = vunpack.c.l.b16 %v200
    %v457 = vunpack.c.l.b16 %v201
    %v458 = vunpack.c.l.b16 %v202
    %v459 = vunpack.c.l.b16 %v203
    %v460 = vunpack.c.l.b16 %v204
    %v461 = vunpack.c.l.b16 %v205
    %v462 = vunpack.c.l.b16 %v206
    %v463 = vunpack.c.l.b16 %v207
    %v464 = vunpack.c.l.b16 %v208
    %v465 = vunpack.c.l.b16 %v209
    %v466 = vunpack.c.l.b16 %v210
    %v467 = vunpack.c.l.b16 %v211
    %v468 = vunpack.c.l.b16 %v212
    %v469 = vunpack.c.l.b16 %v213
    %v470 = vunpack.c.l.b16 %v214
    %v471 = vunpack.c.l.b16 %v215
    %v472 = vunpack.c.l.b16 %v216
    %v473 = vunpack.c.l.b16 %v217
    %v474 = vunpack.c.l.b16 %v218
    %v475 = vunpack.c.l.b16 %v219
    %v476 = vunpack.c.l.b16 %v220
    %v477 = vunpack.c.l.b16 %v221
    %v478 = vunpack.c.l.b16 %v222
    %v479 = vunpack.c.l.b16 %v223
    %v480 = vunpack.c.l.b16 %v224
    %v481 = vunpack.c.l.b16 %v225
    %v482 = vunpack.c.l.b16 %v226
    %v483 = vunpack.c.l.b16 %v227
    %v484 = vunpack.c.l.b16 %v228
    %v485 = vunpack.c.l.b16 %v229
    %v486 = vunpack.c.l.b16 %v230
    %v487 = vunpack.c.l.b16 %v231
    %v488 = vunpack.c.l.b16 %v232
    %v489 = vunpack.c.l.b16 %v233
    %v490 = vunpack.c.l.b16 %v234
    %v491 = vunpack.c.l.b16 %v235
    %v492 = vunpack.c.l.b16 %v236
    %v493 = vunpack.c.l.b16 %v237
    %v494 = vunpack.c.l.b16 %v238
    %v495 = vunpack.c.l.b16 %v239
    %v496 = vunpack.c.l.b16 %v240
    %v497 = vunpack.c.l.b16 %v241
    %v498 = vunpack.c.l.b16 %v242
    %v499 = vunpack.c.l.b16 %v243
    %v500 = vunpack.c.l.b16 %v244
    %v501 = vpack.c.b16 %v374, %v373
    %v502 = vpack.c.b16 %v376, %v375
    %v503 = vpack.c.b16 %v378, %v377
    %v504 = vpack.c.b16 %v380, %v379
    %v505 = vpack.c.b16 %v382, %v381
    %v506 = vpack.c.b16 %v384, %v383
    %v507 = vpack.c.b16 %v386, %v385
    %v508 = vpack.c.b16 %v388, %v387
    %v509 = vpack.c.b16 %v390, %v389
    %v510 = vpack.c.b16 %v392, %v391
    %v511 = vpack.c.b16 %v394, %v393
    %v512 = vpack.c.b16 %v396, %v395
    %v513 = vpack.c.b16 %v398, %v397
    %v514 = vpack.c.b16 %v400, %v399
    %v515 = vpack.c.b16 %v402, %v401
    %v516 = vpack.c.b16 %v404, %v403
    %v517 = vpack.c.b16 %v406, %v405
    %v518 = vpack.c.b16 %v408, %v407
    %v519 = vpack.c.b16 %v410, %v409
    %v520 = vpack.c.b16 %v412, %v411
    %v521 = vpack.c.b16 %v414, %v413
    %v522 = vpack.c.b16 %v416, %v415
    %v523 = vpack.c.b16 %v418, %v417
    %v524 = vpack.c.b16 %v420, %v419
    %v525 = vpack.c.b16 %v422, %v421
    %v526 = vpack.c.b16 %v424, %v423
    %v527 = vpack.c.b16 %v426, %v425
    %v528 = vpack.c.b16 %v428, %v427
    %v529 = vpack.c.b16 %v430, %v429
    %v530 = vpack.c.b16 %v432, %v431
    %v531 = vpack.c.b16 %v434, %v433
    %v532 = vpack.c.b16 %v436, %v435
    %v533 = vpack.c.b16 %v438, %v437
    %v534 = vpack.c.b16 %v440, %v439
    %v535 = vpack.c.b16 %v442, %v441
    %v536 = vpack.c.b16 %v444, %v443
    %v537 = vpack.c.b16 %v446, %v445
    %v538 = vpack.c.b16 %v448, %v447
    %v539 = vpack.c.b16 %v450, %v449
    %v540 = vpack.c.b16 %v452, %v451
    %v541 = vpack.c.b16 %v454, %v453
    %v542 = vpack.c.b16 %v456, %v455
    %v543 = vpack.c.b16 %v458, %v457
    %v544 = vpack.c.b16 %v460, %v459
    %v545 = vpack.c.b16 %v462, %v461
    %v546 = vpack.c.b16 %v464, %v463
    %v547 = vpack.c.b16 %v466, %v465
    %v548 = vpack.c.b16 %v468, %v467
    %v549 = vpack.c.b16 %v470, %v469
    %v550 = vpack.c.b16 %v472, %v471
    %v551 = vpack.c.b16 %v474, %v473
    %v552 = vpack.c.b16 %v476, %v475
    %v553 = vpack.c.b16 %v478, %v477
    %v554 = vpack.c.b16 %v480, %v479
    %v555 = vpack.c.b16 %v482, %v481
    %v556 = vpack.c.b16 %v484, %v483
    %v557 = vpack.c.b16 %v486, %v485
    %v558 = vpack.c.b16 %v488, %v487
    %v559 = vpack.c.b16 %v490, %v489
    %v560 = vpack.c.b16 %v492, %v491
    %v561 = vpack.c.b16 %v494, %v493
    %v562 = vpack.c.b16 %v496, %v495
    %v563 = vpack.c.b16 %v498, %v497
    %v564 = vpack.c.b16 %v500, %v499
    %629 = vmatprep.subr.bf16.mxu0 0
    %630 = vmatpush1.bf16.msra.mxu0 %v508
    %631 = vmatprep.subr.bf16.mxu0 0
    %632 = vmatpush1.bf16.msra.mxu0 %v507
    %633 = vmatprep.subr.bf16.mxu0 0
    %634 = vmatpush1.bf16.msra.mxu0 %v506
    %635 = vmatprep.subr.bf16.mxu0 0
    %636 = vmatpush1.bf16.msra.mxu0 %v505
    %637 = vmatprep.subr.bf16.mxu0 0
    %638 = vmatpush1.bf16.msra.mxu0 %v504
    %639 = vmatprep.subr.bf16.mxu0 0
    %640 = vmatpush1.bf16.msra.mxu0 %v503
    %641 = vmatprep.subr.bf16.mxu0 0
    %642 = vmatpush1.bf16.msra.mxu0 %v502
    %643 = vmatprep.subr.bf16.mxu0 0
    %644 = vmatpush1.bf16.msra.mxu0 %v501
    %645 = vmatprep.subr.bf16.mxu0 0
    %646 = vmatpush2.bf16.msra.mxu0 %v516
    %647 = vmatprep.subr.bf16.mxu0 0
    %648 = vmatpush2.bf16.msra.mxu0 %v515
    %649 = vmatprep.subr.bf16.mxu0 0
    %650 = vmatpush2.bf16.msra.mxu0 %v514
    %651 = vmatprep.subr.bf16.mxu0 0
    %652 = vmatpush2.bf16.msra.mxu0 %v513
    %653 = vmatprep.subr.bf16.mxu0 0
    %654 = vmatpush2.bf16.msra.mxu0 %v512
    %655 = vmatprep.subr.bf16.mxu0 0
    %656 = vmatpush2.bf16.msra.mxu0 %v511
    %657 = vmatprep.subr.bf16.mxu0 0
    %658 = vmatpush2.bf16.msra.mxu0 %v510
    %659 = vmatprep.subr.bf16.mxu0 0
    %660 = vmatpush2.bf16.msra.mxu0 %v509
    %661 = vmatprep.mubr.bf16.mxu0 %v110
    %662 = vmatmul.mubr.bf16.gmra.mxu0 %v109
    %v663 = vpop.f32.mrf.mxu0
    %v664 = vadd.f32 0.0, %v663
    %v665 = vpop.f32.mrf.mxu0
    %v666 = vpop.f32.mrf.mxu0
    %v667 = vpop.f32.mrf.mxu0
    %668 = vdwg.mxu0
    %669 = vmatprep.subr.bf16.mxu0 0
    %670 = vmatpush1.bf16.msra.mxu0 %v524
    %671 = vmatprep.subr.bf16.mxu0 0
    %672 = vmatpush1.bf16.msra.mxu0 %v523
    %673 = vmatprep.subr.bf16.mxu0 0
    %674 = vmatpush1.bf16.msra.mxu0 %v522
    %675 = vmatprep.subr.bf16.mxu0 0
    %676 = vmatpush1.bf16.msra.mxu0 %v521
    %677 = vmatprep.subr.bf16.mxu0 0
    %678 = vmatpush1.bf16.msra.mxu0 %v520
    %679 = vmatprep.subr.bf16.mxu0 0
    %680 = vmatpush1.bf16.msra.mxu0 %v519
    %681 = vmatprep.subr.bf16.mxu0 0
    %682 = vmatpush1.bf16.msra.mxu0 %v518
    %683 = vmatprep.subr.bf16.mxu0 0
    %684 = vmatpush1.bf16.msra.mxu0 %v517
    %685 = vmatprep.subr.bf16.mxu0 0
    %686 = vmatpush2.bf16.msra.mxu0 %v532
    %687 = vmatprep.subr.bf16.mxu0 0
    %688 = vmatpush2.bf16.msra.mxu0 %v531
    %689 = vmatprep.subr.bf16.mxu0 0
    %690 = vmatpush2.bf16.msra.mxu0 %v530
    %691 = vmatprep.subr.bf16.mxu0 0
    %692 = vmatpush2.bf16.msra.mxu0 %v529
    %693 = vmatprep.subr.bf16.mxu0 0
    %694 = vmatpush2.bf16.msra.mxu0 %v528
    %695 = vmatprep.subr.bf16.mxu0 0
    %696 = vmatpush2.bf16.msra.mxu0 %v527
    %697 = vmatprep.subr.bf16.mxu0 0
    %698 = vmatpush2.bf16.msra.mxu0 %v526
    %699 = vmatprep.subr.bf16.mxu0 0
    %700 = vmatpush2.bf16.msra.mxu0 %v525
    %701 = vmatprep.mubr.bf16.mxu0 %v112
    %702 = vmatmul.mubr.bf16.gmra.mxu0 %v111
    %v703 = vpop.f32.mrf.mxu0
    %v704 = vadd.f32 %v664, %v703
    %v705 = vpop.f32.mrf.mxu0
    %v706 = vpop.f32.mrf.mxu0
    %v707 = vpop.f32.mrf.mxu0
    %708 = vdwg.mxu0
    %709 = vmatprep.subr.bf16.mxu0 0
    %710 = vmatpush1.bf16.msra.mxu0 %v540
    %711 = vmatprep.subr.bf16.mxu0 0
    %712 = vmatpush1.bf16.msra.mxu0 %v539
    %713 = vmatprep.subr.bf16.mxu0 0
    %714 = vmatpush1.bf16.msra.mxu0 %v538
    %715 = vmatprep.subr.bf16.mxu0 0
    %716 = vmatpush1.bf16.msra.mxu0 %v537
    %717 = vmatprep.subr.bf16.mxu0 0
    %718 = vmatpush1.bf16.msra.mxu0 %v536
    %719 = vmatprep.subr.bf16.mxu0 0
    %720 = vmatpush1.bf16.msra.mxu0 %v535
    %721 = vmatprep.subr.bf16.mxu0 0
    %722 = vmatpush1.bf16.msra.mxu0 %v534
    %723 = vmatprep.subr.bf16.mxu0 0
    %724 = vmatpush1.bf16.msra.mxu0 %v533
    %725 = vmatprep.subr.bf16.mxu0 0
    %726 = vmatpush2.bf16.msra.mxu0 %v548
    %727 = vmatprep.subr.bf16.mxu0 0
    %728 = vmatpush2.bf16.msra.mxu0 %v547
    %729 = vmatprep.subr.bf16.mxu0 0
    %730 = vmatpush2.bf16.msra.mxu0 %v546
    %731 = vmatprep.subr.bf16.mxu0 0
    %732 = vmatpush2.bf16.msra.mxu0 %v545
    %733 = vmatprep.subr.bf16.mxu0 0
    %734 = vmatpush2.bf16.msra.mxu0 %v544
    %735 = vmatprep.subr.bf16.mxu0 0
    %736 = vmatpush2.bf16.msra.mxu0 %v543
    %737 = vmatprep.subr.bf16.mxu0 0
    %738 = vmatpush2.bf16.msra.mxu0 %v542
    %739 = vmatprep.subr.bf16.mxu0 0
    %740 = vmatpush2.bf16.msra.mxu0 %v541
    %741 = vmatprep.mubr.bf16.mxu0 %v114
    %742 = vmatmul.mubr.bf16.gmra.mxu0 %v113
    %v743 = vpop.f32.mrf.mxu0
    %v744 = vadd.f32 %v704, %v743
    %v745 = vpop.f32.mrf.mxu0
    %v746 = vpop.f32.mrf.mxu0
    %v747 = vpop.f32.mrf.mxu0
    %748 = vdwg.mxu0
    %749 = vmatprep.subr.bf16.mxu0 0
    %750 = vmatpush1.bf16.msra.mxu0 %v556
    %751 = vmatprep.subr.bf16.mxu0 0
    %752 = vmatpush1.bf16.msra.mxu0 %v555
    %753 = vmatprep.subr.bf16.mxu0 0
    %754 = vmatpush1.bf16.msra.mxu0 %v554
    %755 = vmatprep.subr.bf16.mxu0 0
    %756 = vmatpush1.bf16.msra.mxu0 %v553
    %757 = vmatprep.subr.bf16.mxu0 0
    %758 = vmatpush1.bf16.msra.mxu0 %v552
    %759 = vmatprep.subr.bf16.mxu0 0
    %760 = vmatpush1.bf16.msra.mxu0 %v551
    %761 = vmatprep.subr.bf16.mxu0 0
    %762 = vmatpush1.bf16.msra.mxu0 %v550
    %763 = vmatprep.subr.bf16.mxu0 0
    %764 = vmatpush1.bf16.msra.mxu0 %v549
    %765 = vmatprep.subr.bf16.mxu0 0
    %766 = vmatpush2.bf16.msra.mxu0 %v564
    %767 = vmatprep.subr.bf16.mxu0 0
    %768 = vmatpush2.bf16.msra.mxu0 %v563
    %769 = vmatprep.subr.bf16.mxu0 0
    %770 = vmatpush2.bf16.msra.mxu0 %v562
    %771 = vmatprep.subr.bf16.mxu0 0
    %772 = vmatpush2.bf16.msra.mxu0 %v561
    %773 = vmatprep.subr.bf16.mxu0 0
    %774 = vmatpush2.bf16.msra.mxu0 %v560
    %775 = vmatprep.subr.bf16.mxu0 0
    %776 = vmatpush2.bf16.msra.mxu0 %v559
    %777 = vmatprep.subr.bf16.mxu0 0
    %778 = vmatpush2.bf16.msra.mxu0 %v558
    %779 = vmatprep.subr.bf16.mxu0 0
    %780 = vmatpush2.bf16.msra.mxu0 %v557
    %781 = vmatprep.mubr.bf16.mxu0 %v116
    %782 = vmatmul.mubr.bf16.gmra.mxu0 %v115
    %v783 = vpop.f32.mrf.mxu0
    %v784 = vadd.f32 %v744, %v783
    %v785 = vpop.f32.mrf.mxu0
    %v786 = vpop.f32.mrf.mxu0
    %v787 = vpop.f32.mrf.mxu0
    %788 = vdwg.mxu0
    %v789 = vadd.f32 %v62, %v784
    %790 = vst [vmem:[#allocation2] sm:$0x3] %v789
    // Predicated region
    $region42: #{_soft_rnn_gate_jit.1} parent=1 // pred_check
      %p791 = pneg %p50
    $region43: #{_soft_rnn_gate_jit.1} parent=1 // pred_check_branch
      %793 = sbr.rel (%p791) target = $region45
    $region44: #{_soft_rnn_gate_jit.1} parent=1 // pred_region
      %v794 = vld [vmem:[%s2] sm:$0x3]
      %v795 = vld [vmem:[%s3] sm:$0x3]
      %v796 = vld [vmem:[#allocation2] sm:$0x3]
      %v797 = vpack.c.bf16 %v794, %v794
      %v798 = vld [vmem:[%s4] sm:$0xf]
      %v799 = vld [vmem:[%s4 + $0x4] sm:$0xf]
      %v800 = vld [vmem:[%s4 + $0x8] sm:$0xf]
      %v801 = vld [vmem:[%s4 + $0xc] sm:$0xf]
      %v806 = vunpack.c.l.b16 %v798
      %v807 = vunpack.c.l.b16 %v799
      %v808 = vunpack.c.l.b16 %v800
      %v809 = vunpack.c.l.b16 %v801
      %v810 = vpack.c.b16 %v807, %v806
      %v811 = vpack.c.b16 %v809, %v808
      %vm814 = vcmask 261120
      %v816 = vsel %vm814, %v797, 0
      %818 = vmatprep.subr.bf16.mxu0 0
      %819 = vmatpush1.bf16.msra.mxu0 0
      %820 = vmatprep.subr.bf16.mxu0 0
      %821 = vmatpush1.bf16.msra.mxu0 0
      %822 = vmatprep.subr.bf16.mxu0 0
      %823 = vmatpush1.bf16.msra.mxu0 0
      %824 = vmatprep.subr.bf16.mxu0 0
      %825 = vmatpush1.bf16.msra.mxu0 0
      %826 = vmatprep.subr.bf16.mxu0 0
      %827 = vmatpush1.bf16.msra.mxu0 0
      %828 = vmatprep.subr.bf16.mxu0 0
      %829 = vmatpush1.bf16.msra.mxu0 0
      %830 = vmatprep.subr.bf16.mxu0 0
      %831 = vmatpush1.bf16.msra.mxu0 %v811
      %832 = vmatprep.subr.bf16.mxu0 0
      %833 = vmatpush1.bf16.msra.mxu0 %v810
      %834 = vmatprep.subr.bf16.mxu0 0
      %835 = vmatpush2.bf16.msra.mxu0 0
      %836 = vmatprep.subr.bf16.mxu0 0
      %837 = vmatpush2.bf16.msra.mxu0 0
      %838 = vmatprep.subr.bf16.mxu0 0
      %839 = vmatpush2.bf16.msra.mxu0 0
      %840 = vmatprep.subr.bf16.mxu0 0
      %841 = vmatpush2.bf16.msra.mxu0 0
      %842 = vmatprep.subr.bf16.mxu0 0
      %843 = vmatpush2.bf16.msra.mxu0 0
      %844 = vmatprep.subr.bf16.mxu0 0
      %845 = vmatpush2.bf16.msra.mxu0 0
      %846 = vmatprep.subr.bf16.mxu0 0
      %847 = vmatpush2.bf16.msra.mxu0 0
      %848 = vmatprep.subr.bf16.mxu0 0
      %849 = vmatpush2.bf16.msra.mxu0 0
      %850 = vmatprep.mubr.bf16.mxu0 0
      %851 = vmatmul.mubr.bf16.gmra.mxu0 %v816
      %v852 = vpop.f32.mrf.mxu0
      %v853 = vadd.f32 0.0, %v852
      %v854 = vpop.f32.mrf.mxu0
      %v855 = vpop.f32.mrf.mxu0
      %v856 = vpop.f32.mrf.mxu0
      %857 = vdwg.mxu0
      %v858 = vadd.f32 %v796, %v853
      %v859 = vlaneseq
      %v860 = vand.u32 %v859, 127
      %vm861 = vcmp.ge.s32.totalorder %v860, 64
      %vm862 = vcmp.lt.s32.totalorder %v860, 96
      %vm863 = vmand %vm861, %vm862
      %v864 = vmul.f32 %v858, 2.0
      %v865 = vsel %vm863, %v864, %v858
      %v866 = vxor.u32 %v865, 2147483648
      %v867 = vmul.f32 %v866, 1.442695
      %v868 = vpow.pop %v867
      %v869 = vadd.f32 %v868, 1.0
      %v870 = vrcp.pop %v869
      %v871 = vmul.f32 1.0, %v870
      %v872 = vmul.f32 %v871, 2.0
      %v873 = vsub.f32 %v872, 1.0
      %v874 = vsel %vm863, %v873, %v871
      %876 = vrot.lane.b32.xlu0 %v795, 32
      %v877 = vpop.permute.xlu0 %876
      %v879 = vmul.f32 %v874, %v877
      %881 = vrot.lane.b32.xlu0 %v874, 64
      %v882 = vpop.permute.xlu0 %881
      %v884 = vmul.f32 %v874, %v882
      %886 = vrot.lane.b32.xlu0 %v884, 32
      %v887 = vpop.permute.xlu0 %886
      %v889 = vadd.f32 %v879, %v887
      %v890 = vtanh.pop %v889
      %892 = vrot.lane.b32.xlu0 %v890, 64
      %v893 = vpop.permute.xlu0 %892
      %v895 = vmul.f32 %v874, %v893
      %v896 = vld [vmem:[%s6] sm:$0x1]
      %v898 = vlaneseq
      %v899 = vshrl.u32 %v898, 7
      %v900 = vsub.s32 0, %v899
      %v901 = vrot.slane %v896, %v900
      %902 = vrot.lane.b32.xlu0 %v901, 96
      %v903 = vpop.permute.xlu0 %902
      %v905 = vmul.f32 %v895, %v903
      %907 = vrot.lane.b32.xlu0 %v905, 32
      %v908 = vpop.permute.xlu0 %907
      %vm910 = vcmask 254976
      %v911 = vsel %vm910, %v908, 0.0
      %912 = vadd.xlane.f32.xlu0 %v911
      %v913 = vpop.xlane.xlu0 %912
      %s914 = sld [smem:[#allocation3]]
      %v915 = vstv %s914
      %v916 = vadd.f32 %v913, %v915
      %v917 = vxor.u32 %v916, 2147483648
      %v918 = vmul.f32 %v917, 1.442695
      %v919 = vpow.pop %v918
      %v920 = vadd.f32 %v919, 1.0
      %v921 = vrcp.pop %v920
      %v922 = vmul.f32 1.0, %v921
      %vm923 = vcmask 1024
      %924 = vst.msk [vmem:[%s8] sm:$0x3] %vm923, %v922
      %926 = vrot.lane.b32.xlu0 %v895, 32
      %v927 = vpop.permute.xlu0 %926
      %929 = vst.msk [vmem:[#allocation7] sm:$0x3] %vm910, %v927
      %931 = vrot.lane.b32.xlu0 %v889, 96
      %v932 = vpop.permute.xlu0 %931
      %934 = vst.msk [vmem:[#allocation8] sm:$0x3] %vm910, %v932
    $region45: #{_soft_rnn_gate_jit.1} parent=1 // pred_fallthru
      _
    // Predicated region
    $region46: #{_soft_rnn_gate_jit.1} parent=1 // pred_check
      _
    $region47: #{_soft_rnn_gate_jit.1} parent=1 // pred_check_branch
      %936 = sbr.rel (0) target = $region49
    $region48: #{_soft_rnn_gate_jit.1} parent=1 // pred_region
      _
    $region49: #{_soft_rnn_gate_jit.1} parent=1 // pred_fallthru
      _
    // Predicated region
    $region50: #{_soft_rnn_gate_jit.1} parent=1 // pred_check
      _
    $region51: #{_soft_rnn_gate_jit.1} parent=1 // pred_check_branch
      %938 = sbr.rel (0) target = $region53
    $region52: #{_soft_rnn_gate_jit.1} parent=1 // pred_region
      %s940 = ssub.s32 32, 32
      %941 = vsyncadd [#allocation6], %s940
      %s943 = sshll.u32 [#allocation7], 4
      %s944 = int_to_ptr.vmem [resolvable:$true] %s943
      %946 = dma.vmem_to_hbm [thread:$0]  %s944, 32, %s9, [#allocation6]
    $region53: #{_soft_rnn_gate_jit.1} parent=1 // pred_fallthru
      _
    // Predicated region
    $region54: #{_soft_rnn_gate_jit.1} parent=1 // pred_check
      _
    $region55: #{_soft_rnn_gate_jit.1} parent=1 // pred_check_branch
      %948 = sbr.rel (0) target = $region57
    $region56: #{_soft_rnn_gate_jit.1} parent=1 // pred_region
      %s950 = ssub.s32 32, 32
      %951 = vsyncadd [#allocation9], %s950
      %s953 = sshll.u32 [#allocation8], 4
      %s954 = int_to_ptr.vmem [resolvable:$true] %s953
      %956 = dma.vmem_to_hbm [thread:$0]  %s954, 32, %s10, [#allocation9]
    $region57: #{_soft_rnn_gate_jit.1} parent=1 // pred_fallthru
      _
    // Predicated region
    $region58: #{_soft_rnn_gate_jit.1} parent=1 // pred_check
      _
    $region59: #{_soft_rnn_gate_jit.1} parent=1 // pred_check_branch
      %958 = sbr.rel (0) target = $region61
    $region60: #{_soft_rnn_gate_jit.1} parent=1 // pred_region
      _
    $region61: #{_soft_rnn_gate_jit.1} parent=1 // pred_fallthru
      _
    // Predicated region
    $region62: #{_soft_rnn_gate_jit.1} parent=1 // pred_check
      _
    $region63: #{_soft_rnn_gate_jit.1} parent=1 // pred_check_branch
      %960 = sbr.rel (0) target = $region65
    $region64: #{_soft_rnn_gate_jit.1} parent=1 // pred_region
      %961 = dma.done [#allocation6], 32
    $region65: #{_soft_rnn_gate_jit.1} parent=1 // pred_fallthru
      _
    // Predicated region
    $region66: #{_soft_rnn_gate_jit.1} parent=1 // pred_check
      _
    $region67: #{_soft_rnn_gate_jit.1} parent=1 // pred_check_branch
      %963 = sbr.rel (0) target = $region69
    $region68: #{_soft_rnn_gate_jit.1} parent=1 // pred_region
      %964 = dma.done [#allocation9], 32
    $region69: #{_soft_rnn_gate_jit.1} parent=1 // pred_fallthru
      _
    %965 = vsyncpa [#allocation5], 1
    %966 = vsyncpa [#allocation6], 1
    %967 = vsyncpa [#allocation9], 1

</llo_original>
